<compile_context>
chip_gen: v5e
topology: v5e:2x2
jax: 0.10.0
libtpu: 0.0.40
codegen_flags: <defaults>
</compile_context>

<pallas_src>
import math
import functools

import jax
import jax.numpy as jnp
from jax import lax
from jax.experimental import pallas as pl
from jax.experimental.pallas import tpu as pltpu


_MXU_M_ALIGN = 256   # preferred M multiple for v6e/v7x MXU passes (128 ok on v5e)
_MXU_M_MIN = 512     # target minimum M before alignment stops mattering


def _tpu_caps():
    """Return (vmem_capacity_bytes, multi_tensorcore) with safe fallbacks."""
    vmem_cap = 128 * 1024 * 1024
    try:
        vmem_cap = int(pltpu.get_tpu_info().vmem_capacity_bytes)
    except Exception:
        pass
    multi_core = False
    try:
        kind = jax.devices()[0].device_kind.lower()
        # v4/v5p megacore and v7x have 2 TensorCores per chip/device.
        multi_core = any(t in kind for t in ("v7", "v5p", "v4")) and "lite" not in kind
    except Exception:
        pass
    return vmem_cap, multi_core


def _cross_attention_kernel(q_ref, k_ref, v_ref,
                            wq_ref, wk_ref, wv_ref, wfc_ref,
                            out_ref, *, n_head, d_k, d_v):
    """One grid step == `block_b` batch elements.

    Block shapes:
      q_ref / out_ref : (Bb, Lq, D)
      k_ref, v_ref    : (Bb, Lk, D)
      wq_ref, wk_ref  : (D, H*d_k)  bf16, pre-transposed; wq pre-scaled by 1/sqrt(d_k)
      wv_ref          : (D, H*d_v)  bf16, pre-transposed
      wfc_ref         : (H*d_v, D)  bf16, pre-transposed
    """
    Bb, Lq, D = q_ref.shape
    Lk = k_ref.shape[1]
    Lv = v_ref.shape[1]
    cd = jnp.bfloat16                                   # MXU operand dtype

    q_in = q_ref[...].astype(jnp.float32)               # residual kept in f32

    # Flattened (Bb*L, D) slabs: bigger M for the MXU.
    # (If L is not a multiple of 8 these reshapes still lower correctly but may
    #  materialize a relayout copy.)
    q2 = q_in.reshape(Bb * Lq, D).astype(cd)
    k2 = k_ref[...].reshape(Bb * Lk, D).astype(cd)
    v2 = v_ref[...].reshape(Bb * Lv, D).astype(cd)

    # Fused Q/K/V projections: bf16 operands, f32 accumulation, bf16 results
    # (they only feed further matmuls).  Query scale is folded into wq.
    Q = jnp.dot(q2, wq_ref[...], preferred_element_type=jnp.float32).astype(cd)
    K = jnp.dot(k2, wk_ref[...], preferred_element_type=jnp.float32).astype(cd)
    V = jnp.dot(v2, wv_ref[...], preferred_element_type=jnp.float32).astype(cd)

    Q = Q.reshape(Bb, Lq, n_head * d_k)
    K = K.reshape(Bb, Lk, n_head * d_k)
    V = V.reshape(Bb, Lv, n_head * d_v)

    ctx_heads = []
    for h in range(n_head):                             # static & small -> unrolled
        # Per-head lane slices are static; fused projections keep the MXU N wide
        # at the cost of a few XLU selects per head.
        qh = Q[:, :, h * d_k:(h + 1) * d_k]             # (Bb, Lq, dk), pre-scaled
        kh = K[:, :, h * d_k:(h + 1) * d_k]             # (Bb, Lk, dk)
        vh = V[:, :, h * d_v:(h + 1) * d_v]             # (Bb, Lv, dv)

        # scores = qh @ kh^T, batched over Bb, contracting d_k of both operands
        # (no explicit transposes materialized).
        s = lax.dot_general(qh, kh, (((2,), (2,)), ((0,), (0,))),
                            preferred_element_type=jnp.float32)      # (Bb, Lq, Lk) f32

        # Numerically stable softmax in f32; denominator reciprocal on the EUP.
        s = s - jnp.max(s, axis=-1, keepdims=True)
        p = jnp.exp(s)
        denom = jnp.sum(p, axis=-1, keepdims=True)                    # (Bb, Lq, 1)
        inv = pl.reciprocal(denom, approx=True)

        if Lk > d_v:
            # Deferred normalization: scale the (Lq, d_v) context instead of the
            # (Lq, Lk) probability tile -> fewer VPU multiplies.
            ctx = lax.dot_general(p.astype(cd), vh, (((2,), (1,)), ((0,), (0,))),
                                  preferred_element_type=jnp.float32)  # (Bb, Lq, dv)
            ctx = ctx * inv
        else:
            p = p * inv
            ctx = lax.dot_general(p.astype(cd), vh, (((2,), (1,)), ((0,), (0,))),
                                  preferred_element_type=jnp.float32)
        ctx_heads.append(ctx.astype(cd))

    # Fused concat + final projection: one matmul with contraction depth H*d_v.
    ctx_all = jnp.concatenate(ctx_heads, axis=-1).reshape(Bb * Lq, n_head * d_v)
    proj = jnp.dot(ctx_all, wfc_ref[...], preferred_element_type=jnp.float32)

    out = proj.reshape(Bb, Lq, D) + q_in                # residual add in f32
    out_ref[...] = out.astype(out_ref.dtype)


def _pick_block_b(B, Lq, Lk, Lv, D, n_head, d_k, d_v, in_itemsize,
                  vmem_budget_bytes, multi_core):
    """Largest divisor of B that fits VMEM, preferring MXU-aligned M = bb*Lq,
    and (on multi-TensorCore parts) a grid of at least 2 steps."""
    per_b = (
        2 * in_itemsize * (Lq + Lk + Lv + Lq) * D                           # double-buffered q/k/v/out
        + 2 * (Lq * n_head * d_k + Lk * n_head * d_k + Lv * n_head * d_v)   # bf16 Q/K/V
        + 4 * 2 * Lq * Lk                                                   # f32 scores + exp (live head)
        + (4 + 2) * n_head * Lq * d_v                                       # f32 ctx + bf16 copies
        + 4 * 2 * Lq * D                                                    # f32 proj + out
    )
    divisors = [d for d in range(1, B + 1) if B % d == 0]
    fitting = [d for d in divisors if d * per_b <= vmem_budget_bytes] or [1]

    def rank(bb):
        m = bb * Lq
        return (m >= _MXU_M_MIN and m % _MXU_M_ALIGN == 0, m % 128 == 0, m)

    bb = max(fitting, key=rank)

    if multi_core and bb == B and B > 1:
        # Keep both TensorCores busy: largest fitting divisor giving grid >= 2.
        smaller = [d for d in fitting if d <= B // 2]
        if smaller:
            bb = max(smaller, key=rank)
    return bb


def cross_attention_wx2(q, k, v, w_qs, w_ks, w_vs, w_fc, *,
                        n_head, d_k, d_v, block_b=None):
    """Pallas wrapper: grid over batch blocks, full sequence/feature per block."""
    B, Lq, D = q.shape
    _, Lk, _ = k.shape
    _, Lv, _ = v.shape
    assert Lk == Lv, "attention requires len_k == len_v"
    assert w_qs.shape == (n_head * d_k, D)
    assert w_ks.shape == (n_head * d_k, D)
    assert w_vs.shape == (n_head * d_v, D)
    assert w_fc.shape == (D, n_head * d_v)

    # Host-side (one-time) weight preprocessing:
    #  - transpose to (in_features, out_features) so the kernel never transposes
    #  - fold the 1/sqrt(d_k) query scale into w_qs
    #  - cast to bf16 (native MXU operand dtype on v5e/v6e/v7x)
    scale = 1.0 / math.sqrt(d_k)
    wq_t = (w_qs.astype(jnp.float32) * scale).T.astype(jnp.bfloat16)   # (D, H*dk)
    wk_t = w_ks.T.astype(jnp.bfloat16)                                  # (D, H*dk)
    wv_t = w_vs.T.astype(jnp.bfloat16)                                  # (D, H*dv)
    wfc_t = w_fc.T.astype(jnp.bfloat16)                                 # (H*dv, D)
    # (If k is always the same tensor as v, the K/V projections could further be
    #  fused into a single wider matmul; not done here since the module allows
    #  distinct k and v inputs.)

    vmem_cap, multi_core = _tpu_caps()
    if block_b is None:
        block_b = _pick_block_b(B, Lq, Lk, Lv, D, n_head, d_k, d_v,
                                in_itemsize=q.dtype.itemsize,
                                vmem_budget_bytes=int(0.45 * vmem_cap),
                                multi_core=multi_core)
    assert B % block_b == 0
    grid = (B // block_b,)

    kernel = functools.partial(
        _cross_attention_kernel, n_head=n_head, d_k=d_k, d_v=d_v)

    # Advisory cost estimate for the XLA scheduler.  Weights are counted once:
    # their constant index maps keep them resident in VMEM across grid steps.
    flops = 2 * B * (Lq * D * n_head * d_k            # Q proj
                     + Lk * D * n_head * d_k          # K proj
                     + Lv * D * n_head * d_v          # V proj
                     + n_head * (Lq * Lk * d_k + Lq * Lv * d_v)   # QK^T, attn@V
                     + Lq * n_head * d_v * D)         # fc
    transcendentals = B * n_head * Lq * Lk
    nbytes = lambda a: a.size * a.dtype.itemsize
    bytes_accessed = (nbytes(q) + nbytes(k) + nbytes(v)
                      + B * Lq * D * q.dtype.itemsize
                      + nbytes(wq_t) + nbytes(wk_t) + nbytes(wv_t) + nbytes(wfc_t))

    def build_and_call(single_buffer_weights):
        def wspec(shape):
            if single_buffer_weights:
                # Grid-invariant operands: no need for double buffering.
                return pl.BlockSpec(shape, lambda b: (0,) * len(shape),
                                    pipeline_mode=pl.Buffered(1))
            return pl.BlockSpec(shape, lambda b: (0,) * len(shape))

        grid_spec = pltpu.PrefetchScalarGridSpec(
            num_scalar_prefetch=0,
            grid=grid,
            in_specs=[
                pl.BlockSpec((block_b, Lq, D), lambda b: (b, 0, 0)),
                pl.BlockSpec((block_b, Lk, D), lambda b: (b, 0, 0)),
                pl.BlockSpec((block_b, Lv, D), lambda b: (b, 0, 0)),
                wspec(wq_t.shape),
                wspec(wk_t.shape),
                wspec(wv_t.shape),
                wspec(wfc_t.shape),
            ],
            out_specs=pl.BlockSpec((block_b, Lq, D), lambda b: (b, 0, 0)),
        )

        return pl.pallas_call(
            kernel,
            out_shape=jax.ShapeDtypeStruct((B, Lq, D), q.dtype),
            grid_spec=grid_spec,
            compiler_params=pltpu.CompilerParams(
                dimension_semantics=("parallel",),
                vmem_limit_bytes=int(0.6 * vmem_cap)),
            cost_estimate=pl.CostEstimate(
                flops=flops,
                transcendentals=transcendentals,
                bytes_accessed=bytes_accessed),
        )(q, k, v, wq_t, wk_t, wv_t, wfc_t)

    try:
        return build_and_call(True)
    except Exception:
        # Fallback for jax versions without BlockSpec.pipeline_mode / Buffered(1).
        return build_and_call(False)


def _reference(q, k, v, w_qs, w_ks, w_vs, w_fc, *, n_head, d_k, d_v):
    """Plain-JAX f32 reference mirroring the PyTorch forward (eval mode)."""
    B, Lq, D = q.shape
    Lk = k.shape[1]
    Lv = v.shape[1]
    residual = q
    Q = (q @ w_qs.T).reshape(B, Lq, n_head, d_k).transpose(0, 2, 1, 3)
    K = (k @ w_ks.T).reshape(B, Lk, n_head, d_k).transpose(0, 2, 1, 3)
    V = (v @ w_vs.T).reshape(B, Lv, n_head, d_v).transpose(0, 2, 1, 3)
    attn = jnp.einsum('bhqd,bhkd->bhqk', Q / (d_k ** 0.5), K)
    attn = jax.nn.softmax(attn, axis=-1)
    out = jnp.einsum('bhqk,bhkd->bhqd', attn, V)
    out = out.transpose(0, 2, 1, 3).reshape(B, Lq, n_head * d_v)
    out = out @ w_fc.T
    return out + residual


if __name__ == "__main__":
    # Small shapes consistent with the module's forward.
    B = 2
    len_q = 8
    len_k = 8
    len_v = 8
    d_input = 32
    n_head = 2
    d_k = 16
    d_v = 16

    key = jax.random.PRNGKey(0)
    kq, kk, kv, kwq, kwk, kwv, kwf = jax.random.split(key, 7)

    q = jax.random.normal(kq, (B, len_q, d_input), dtype=jnp.float32)
    k = jax.random.normal(kk, (B, len_k, d_input), dtype=jnp.float32)
    v = jax.random.normal(kv, (B, len_v, d_input), dtype=jnp.float32)

    # Deterministic parameter init (PyTorch Linear weight shape: (out, in)).
    s = 0.05
    w_qs = s * jax.random.normal(kwq, (n_head * d_k, d_input), dtype=jnp.float32)
    w_ks = s * jax.random.normal(kwk, (n_head * d_k, d_input), dtype=jnp.float32)
    w_vs = s * jax.random.normal(kwv, (n_head * d_v, d_input), dtype=jnp.float32)
    w_fc = s * jax.random.normal(kwf, (d_input, n_head * d_v), dtype=jnp.float32)

    out = cross_attention_wx2(q, k, v, w_qs, w_ks, w_vs, w_fc,
                              n_head=n_head, d_k=d_k, d_v=d_v)
    out = jax.block_until_ready(out)

    ref = _reference(q, k, v, w_qs, w_ks, w_vs, w_fc,
                     n_head=n_head, d_k=d_k, d_v=d_v)
    assert out.shape == (B, len_q, d_input)
    # Looser tolerance: bf16 matmul operands + EUP approximate reciprocal
    # (inference-oriented; use f32 operands if training-grade accuracy is needed).
    assert jnp.allclose(out, ref, atol=2e-2, rtol=2e-2), \
        f"max err {jnp.max(jnp.abs(out - ref))}"

    print("KERNEL_OK")
</pallas_src>

<mosaic_0001>
module attributes {stable_mosaic.version = 11 : i64} {
  func.func @_cross_attention_kernel(%arg0: i32, %arg1: memref<2x8x32xf32, #tpu.memory_space<vmem>>, %arg2: memref<2x8x32xf32, #tpu.memory_space<vmem>>, %arg3: memref<2x8x32xf32, #tpu.memory_space<vmem>>, %arg4: memref<32x32xbf16, #tpu.memory_space<vmem>>, %arg5: memref<32x32xbf16, #tpu.memory_space<vmem>>, %arg6: memref<32x32xbf16, #tpu.memory_space<vmem>>, %arg7: memref<32x32xbf16, #tpu.memory_space<vmem>>, %arg8: memref<2x8x32xf32, #tpu.memory_space<vmem>>) attributes {dimension_semantics = [#tpu.dimension_semantics<parallel>], iteration_bounds = array<i64: 1>, scalar_prefetch = 0 : i64, scratch_operands = 0 : i64, tpu.core_type = #tpu.core_type<tc>, window_params = [{transform_indices = @transform_0, window_bounds = array<i64: 2, 8, 32>}, {transform_indices = @transform_1, window_bounds = array<i64: 2, 8, 32>}, {transform_indices = @transform_2, window_bounds = array<i64: 2, 8, 32>}, {pipeline_mode = #tpu.pipeline_mode<synchronous>, transform_indices = @transform_3, window_bounds = array<i64: 32, 32>}, {pipeline_mode = #tpu.pipeline_mode<synchronous>, transform_indices = @transform_4, window_bounds = array<i64: 32, 32>}, {pipeline_mode = #tpu.pipeline_mode<synchronous>, transform_indices = @transform_5, window_bounds = array<i64: 32, 32>}, {pipeline_mode = #tpu.pipeline_mode<synchronous>, transform_indices = @transform_6, window_bounds = array<i64: 32, 32>}, {transform_indices = @transform_7, window_bounds = array<i64: 2, 8, 32>}]} {
    %c0 = arith.constant 0 : index
    %c0_0 = arith.constant 0 : index
    %c0_1 = arith.constant 0 : index
    %0 = vector.load %arg1[%c0, %c0_0, %c0_1] : memref<2x8x32xf32, #tpu.memory_space<vmem>>, vector<2x8x32xf32>
    %1 = vector.shape_cast %0 : vector<2x8x32xf32> to vector<16x32xf32>
    %2 = arith.truncf %1 : vector<16x32xf32> to vector<16x32xbf16>
    %c0_2 = arith.constant 0 : index
    %c0_3 = arith.constant 0 : index
    %c0_4 = arith.constant 0 : index
    %3 = vector.load %arg2[%c0_2, %c0_3, %c0_4] : memref<2x8x32xf32, #tpu.memory_space<vmem>>, vector<2x8x32xf32>
    %4 = vector.shape_cast %3 : vector<2x8x32xf32> to vector<16x32xf32>
    %5 = arith.truncf %4 : vector<16x32xf32> to vector<16x32xbf16>
    %c0_5 = arith.constant 0 : index
    %c0_6 = arith.constant 0 : index
    %c0_7 = arith.constant 0 : index
    %6 = vector.load %arg3[%c0_5, %c0_6, %c0_7] : memref<2x8x32xf32, #tpu.memory_space<vmem>>, vector<2x8x32xf32>
    %7 = vector.shape_cast %6 : vector<2x8x32xf32> to vector<16x32xf32>
    %8 = arith.truncf %7 : vector<16x32xf32> to vector<16x32xbf16>
    %c0_8 = arith.constant 0 : index
    %c0_9 = arith.constant 0 : index
    %9 = vector.load %arg4[%c0_8, %c0_9] : memref<32x32xbf16, #tpu.memory_space<vmem>>, vector<32x32xbf16>
    %cst = arith.constant dense<0.000000e+00> : vector<16x32xf32>
    %10 = tpu.matmul %2, %9, %cst {dimension_numbers = #tpu.dot_dimension_numbers<[1], [0], [0], [1], [0, 0, 1, 1], [], []>} : vector<16x32xbf16>, vector<32x32xbf16>, vector<16x32xf32> -> vector<16x32xf32>
    %11 = arith.truncf %10 : vector<16x32xf32> to vector<16x32xbf16>
    %c0_10 = arith.constant 0 : index
    %c0_11 = arith.constant 0 : index
    %12 = vector.load %arg5[%c0_10, %c0_11] : memref<32x32xbf16, #tpu.memory_space<vmem>>, vector<32x32xbf16>
    %cst_12 = arith.constant dense<0.000000e+00> : vector<16x32xf32>
    %13 = tpu.matmul %5, %12, %cst_12 {dimension_numbers = #tpu.dot_dimension_numbers<[1], [0], [0], [1], [0, 0, 1, 1], [], []>} : vector<16x32xbf16>, vector<32x32xbf16>, vector<16x32xf32> -> vector<16x32xf32>
    %14 = arith.truncf %13 : vector<16x32xf32> to vector<16x32xbf16>
    %c0_13 = arith.constant 0 : index
    %c0_14 = arith.constant 0 : index
    %15 = vector.load %arg6[%c0_13, %c0_14] : memref<32x32xbf16, #tpu.memory_space<vmem>>, vector<32x32xbf16>
    %cst_15 = arith.constant dense<0.000000e+00> : vector<16x32xf32>
    %16 = tpu.matmul %8, %15, %cst_15 {dimension_numbers = #tpu.dot_dimension_numbers<[1], [0], [0], [1], [0, 0, 1, 1], [], []>} : vector<16x32xbf16>, vector<32x32xbf16>, vector<16x32xf32> -> vector<16x32xf32>
    %17 = arith.truncf %16 : vector<16x32xf32> to vector<16x32xbf16>
    %18 = vector.shape_cast %11 : vector<16x32xbf16> to vector<2x8x32xbf16>
    %19 = vector.shape_cast %14 : vector<16x32xbf16> to vector<2x8x32xbf16>
    %20 = vector.shape_cast %17 : vector<16x32xbf16> to vector<2x8x32xbf16>
    %21 = vector.extract_strided_slice %18 {offsets = [0, 0, 0], sizes = [2, 8, 16], strides = [1, 1, 1]} : vector<2x8x32xbf16> to vector<2x8x16xbf16>
    %22 = vector.extract_strided_slice %19 {offsets = [0, 0, 0], sizes = [2, 8, 16], strides = [1, 1, 1]} : vector<2x8x32xbf16> to vector<2x8x16xbf16>
    %23 = vector.extract_strided_slice %20 {offsets = [0, 0, 0], sizes = [2, 8, 16], strides = [1, 1, 1]} : vector<2x8x32xbf16> to vector<2x8x16xbf16>
    %cst_16 = arith.constant dense<0.000000e+00> : vector<2x8x8xf32>
    %24 = tpu.matmul %21, %22, %cst_16 {dimension_numbers = #tpu.dot_dimension_numbers<[2], [2], [1], [1], [0, 0, 0, 1, 1, 1], [0], [0]>} : vector<2x8x16xbf16>, vector<2x8x16xbf16>, vector<2x8x8xf32> -> vector<2x8x8xf32>
    %cst_17 = arith.constant dense<0xFF800000> : vector<2x8xf32>
    %25 = vector.multi_reduction <maximumf>, %24, %cst_17 [2] : vector<2x8x8xf32> to vector<2x8xf32>
    %26 = vector.shape_cast %25 : vector<2x8xf32> to vector<2x8x1xf32>
    %27 = vector.broadcast %26 : vector<2x8x1xf32> to vector<2x8x8xf32>
    %28 = arith.subf %24, %27 : vector<2x8x8xf32>
    %29 = math.exp %28 : vector<2x8x8xf32>
    %cst_18 = arith.constant dense<0.000000e+00> : vector<2x8xf32>
    %30 = vector.multi_reduction <add>, %29, %cst_18 [2] : vector<2x8x8xf32> to vector<2x8xf32>
    %31 = vector.shape_cast %30 : vector<2x8xf32> to vector<2x8x1xf32>
    %32 = tpu.reciprocal %31 {approx = true} : vector<2x8x1xf32> -> vector<2x8x1xf32>
    %33 = vector.broadcast %32 : vector<2x8x1xf32> to vector<2x8x8xf32>
    %34 = arith.mulf %29, %33 : vector<2x8x8xf32>
    %35 = arith.truncf %34 : vector<2x8x8xf32> to vector<2x8x8xbf16>
    %cst_19 = arith.constant dense<0.000000e+00> : vector<2x8x16xf32>
    %36 = tpu.matmul %35, %23, %cst_19 {dimension_numbers = #tpu.dot_dimension_numbers<[2], [1], [1], [2], [0, 0, 0, 1, 1, 2], [0], [0]>} : vector<2x8x8xbf16>, vector<2x8x16xbf16>, vector<2x8x16xf32> -> vector<2x8x16xf32>
    %37 = arith.truncf %36 : vector<2x8x16xf32> to vector<2x8x16xbf16>
    %38 = vector.extract_strided_slice %18 {offsets = [0, 0, 16], sizes = [2, 8, 16], strides = [1, 1, 1]} : vector<2x8x32xbf16> to vector<2x8x16xbf16>
    %39 = vector.extract_strided_slice %19 {offsets = [0, 0, 16], sizes = [2, 8, 16], strides = [1, 1, 1]} : vector<2x8x32xbf16> to vector<2x8x16xbf16>
    %40 = vector.extract_strided_slice %20 {offsets = [0, 0, 16], sizes = [2, 8, 16], strides = [1, 1, 1]} : vector<2x8x32xbf16> to vector<2x8x16xbf16>
    %cst_20 = arith.constant dense<0.000000e+00> : vector<2x8x8xf32>
    %41 = tpu.matmul %38, %39, %cst_20 {dimension_numbers = #tpu.dot_dimension_numbers<[2], [2], [1], [1], [0, 0, 0, 1, 1, 1], [0], [0]>} : vector<2x8x16xbf16>, vector<2x8x16xbf16>, vector<2x8x8xf32> -> vector<2x8x8xf32>
    %cst_21 = arith.constant dense<0xFF800000> : vector<2x8xf32>
    %42 = vector.multi_reduction <maximumf>, %41, %cst_21 [2] : vector<2x8x8xf32> to vector<2x8xf32>
    %43 = vector.shape_cast %42 : vector<2x8xf32> to vector<2x8x1xf32>
    %44 = vector.broadcast %43 : vector<2x8x1xf32> to vector<2x8x8xf32>
    %45 = arith.subf %41, %44 : vector<2x8x8xf32>
    %46 = math.exp %45 : vector<2x8x8xf32>
    %cst_22 = arith.constant dense<0.000000e+00> : vector<2x8xf32>
    %47 = vector.multi_reduction <add>, %46, %cst_22 [2] : vector<2x8x8xf32> to vector<2x8xf32>
    %48 = vector.shape_cast %47 : vector<2x8xf32> to vector<2x8x1xf32>
    %49 = tpu.reciprocal %48 {approx = true} : vector<2x8x1xf32> -> vector<2x8x1xf32>
    %50 = vector.broadcast %49 : vector<2x8x1xf32> to vector<2x8x8xf32>
    %51 = arith.mulf %46, %50 : vector<2x8x8xf32>
    %52 = arith.truncf %51 : vector<2x8x8xf32> to vector<2x8x8xbf16>
    %cst_23 = arith.constant dense<0.000000e+00> : vector<2x8x16xf32>
    %53 = tpu.matmul %52, %40, %cst_23 {dimension_numbers = #tpu.dot_dimension_numbers<[2], [1], [1], [2], [0, 0, 0, 1, 1, 2], [0], [0]>} : vector<2x8x8xbf16>, vector<2x8x16xbf16>, vector<2x8x16xf32> -> vector<2x8x16xf32>
    %54 = arith.truncf %53 : vector<2x8x16xf32> to vector<2x8x16xbf16>
    %55 = tpu.concatenate %37, %54 in 2 : vector<2x8x16xbf16>, vector<2x8x16xbf16> -> vector<2x8x32xbf16>
    %56 = vector.shape_cast %55 : vector<2x8x32xbf16> to vector<16x32xbf16>
    %c0_24 = arith.constant 0 : index
    %c0_25 = arith.constant 0 : index
    %57 = vector.load %arg7[%c0_24, %c0_25] : memref<32x32xbf16, #tpu.memory_space<vmem>>, vector<32x32xbf16>
    %cst_26 = arith.constant dense<0.000000e+00> : vector<16x32xf32>
    %58 = tpu.matmul %56, %57, %cst_26 {dimension_numbers = #tpu.dot_dimension_numbers<[1], [0], [0], [1], [0, 0, 1, 1], [], []>} : vector<16x32xbf16>, vector<32x32xbf16>, vector<16x32xf32> -> vector<16x32xf32>
    %59 = vector.shape_cast %58 : vector<16x32xf32> to vector<2x8x32xf32>
    %60 = arith.addf %59, %0 : vector<2x8x32xf32>
    %c0_27 = arith.constant 0 : index
    %c0_28 = arith.constant 0 : index
    %c0_29 = arith.constant 0 : index
    %61 = vector.load %arg8[%c0_27, %c0_28, %c0_29] : memref<2x8x32xf32, #tpu.memory_space<vmem>>, vector<2x8x32xf32>
    tpu.vector_store %arg8[%c0_27, %c0_28, %c0_29], %60 {strides = array<i32>} : memref<2x8x32xf32, #tpu.memory_space<vmem>>, vector<2x8x32xf32>,
    return
  }
  func.func @transform_0(%arg0: i32) -> (i32, i32, i32) {
    %c0_i32 = arith.constant 0 : i32
    %c0_i32_0 = arith.constant 0 : i32
    %c0_i32_1 = arith.constant 0 : i32
    return %arg0, %c0_i32, %c0_i32_0 : i32, i32, i32
  }
  func.func @transform_1(%arg0: i32) -> (i32, i32, i32) {
    %c0_i32 = arith.constant 0 : i32
    %c0_i32_0 = arith.constant 0 : i32
    %c0_i32_1 = arith.constant 0 : i32
    return %arg0, %c0_i32, %c0_i32_0 : i32, i32, i32
  }
  func.func @transform_2(%arg0: i32) -> (i32, i32, i32) {
    %c0_i32 = arith.constant 0 : i32
    %c0_i32_0 = arith.constant 0 : i32
    %c0_i32_1 = arith.constant 0 : i32
    return %arg0, %c0_i32, %c0_i32_0 : i32, i32, i32
  }
  func.func @transform_3(%arg0: i32) -> (i32, i32) {
    %c0_i32 = arith.constant 0 : i32
    %c0_i32_0 = arith.constant 0 : i32
    %c0_i32_1 = arith.constant 0 : i32
    return %c0_i32, %c0_i32_0 : i32, i32
  }
  func.func @transform_4(%arg0: i32) -> (i32, i32) {
    %c0_i32 = arith.constant 0 : i32
    %c0_i32_0 = arith.constant 0 : i32
    %c0_i32_1 = arith.constant 0 : i32
    return %c0_i32, %c0_i32_0 : i32, i32
  }
  func.func @transform_5(%arg0: i32) -> (i32, i32) {
    %c0_i32 = arith.constant 0 : i32
    %c0_i32_0 = arith.constant 0 : i32
    %c0_i32_1 = arith.constant 0 : i32
    return %c0_i32, %c0_i32_0 : i32, i32
  }
  func.func @transform_6(%arg0: i32) -> (i32, i32) {
    %c0_i32 = arith.constant 0 : i32
    %c0_i32_0 = arith.constant 0 : i32
    %c0_i32_1 = arith.constant 0 : i32
    return %c0_i32, %c0_i32_0 : i32, i32
  }
  func.func @transform_7(%arg0: i32) -> (i32, i32, i32) {
    %c0_i32 = arith.constant 0 : i32
    %c0_i32_0 = arith.constant 0 : i32
    %c0_i32_1 = arith.constant 0 : i32
    return %arg0, %c0_i32, %c0_i32_0 : i32, i32, i32
  }
}

module attributes {stable_mosaic.version = 11 : i64} {
  func.func @_cross_attention_kernel(%arg0: i32, %arg1: memref<2x8x32xf32, #tpu.memory_space<vmem>>, %arg2: memref<2x8x32xf32, #tpu.memory_space<vmem>>, %arg3: memref<2x8x32xf32, #tpu.memory_space<vmem>>, %arg4: memref<32x32xbf16, #tpu.memory_space<vmem>>, %arg5: memref<32x32xbf16, #tpu.memory_space<vmem>>, %arg6: memref<32x32xbf16, #tpu.memory_space<vmem>>, %arg7: memref<32x32xbf16, #tpu.memory_space<vmem>>, %arg8: memref<2x8x32xf32, #tpu.memory_space<vmem>>) attributes {dimension_semantics = [#tpu.dimension_semantics<parallel>], iteration_bounds = array<i64: 1>, scalar_prefetch = 0 : i64, scratch_operands = 0 : i64, tpu.core_type = #tpu.core_type<tc>, window_params = [{transform_indices = @transform_0, window_bounds = array<i64: 2, 8, 32>}, {transform_indices = @transform_1, window_bounds = array<i64: 2, 8, 32>}, {transform_indices = @transform_2, window_bounds = array<i64: 2, 8, 32>}, {pipeline_mode = #tpu.pipeline_mode<synchronous>, transform_indices = @transform_3, window_bounds = array<i64: 32, 32>}, {pipeline_mode = #tpu.pipeline_mode<synchronous>, transform_indices = @transform_4, window_bounds = array<i64: 32, 32>}, {pipeline_mode = #tpu.pipeline_mode<synchronous>, transform_indices = @transform_5, window_bounds = array<i64: 32, 32>}, {pipeline_mode = #tpu.pipeline_mode<synchronous>, transform_indices = @transform_6, window_bounds = array<i64: 32, 32>}, {transform_indices = @transform_7, window_bounds = array<i64: 2, 8, 32>}]} {
    %c0 = arith.constant 0 : index
    %c0_0 = arith.constant 0 : index
    %c0_1 = arith.constant 0 : index
    %0 = vector.load %arg1[%c0, %c0_0, %c0_1] : memref<2x8x32xf32, #tpu.memory_space<vmem>>, vector<2x8x32xf32>
    %1 = vector.shape_cast %0 : vector<2x8x32xf32> to vector<16x32xf32>
    %2 = arith.truncf %1 : vector<16x32xf32> to vector<16x32xbf16>
    %c0_2 = arith.constant 0 : index
    %c0_3 = arith.constant 0 : index
    %c0_4 = arith.constant 0 : index
    %3 = vector.load %arg2[%c0_2, %c0_3, %c0_4] : memref<2x8x32xf32, #tpu.memory_space<vmem>>, vector<2x8x32xf32>
    %4 = vector.shape_cast %3 : vector<2x8x32xf32> to vector<16x32xf32>
    %5 = arith.truncf %4 : vector<16x32xf32> to vector<16x32xbf16>
    %c0_5 = arith.constant 0 : index
    %c0_6 = arith.constant 0 : index
    %c0_7 = arith.constant 0 : index
    %6 = vector.load %arg3[%c0_5, %c0_6, %c0_7] : memref<2x8x32xf32, #tpu.memory_space<vmem>>, vector<2x8x32xf32>
    %7 = vector.shape_cast %6 : vector<2x8x32xf32> to vector<16x32xf32>
    %8 = arith.truncf %7 : vector<16x32xf32> to vector<16x32xbf16>
    %c0_8 = arith.constant 0 : index
    %c0_9 = arith.constant 0 : index
    %9 = vector.load %arg4[%c0_8, %c0_9] : memref<32x32xbf16, #tpu.memory_space<vmem>>, vector<32x32xbf16>
    %cst = arith.constant dense<0.000000e+00> : vector<16x32xf32>
    %10 = tpu.matmul %2, %9, %cst {dimension_numbers = #tpu.dot_dimension_numbers<[1], [0], [0], [1], [0, 0, 1, 1], [], []>} : vector<16x32xbf16>, vector<32x32xbf16>, vector<16x32xf32> -> vector<16x32xf32>
    %11 = arith.truncf %10 : vector<16x32xf32> to vector<16x32xbf16>
    %c0_10 = arith.constant 0 : index
    %c0_11 = arith.constant 0 : index
    %12 = vector.load %arg5[%c0_10, %c0_11] : memref<32x32xbf16, #tpu.memory_space<vmem>>, vector<32x32xbf16>
    %cst_12 = arith.constant dense<0.000000e+00> : vector<16x32xf32>
    %13 = tpu.matmul %5, %12, %cst_12 {dimension_numbers = #tpu.dot_dimension_numbers<[1], [0], [0], [1], [0, 0, 1, 1], [], []>} : vector<16x32xbf16>, vector<32x32xbf16>, vector<16x32xf32> -> vector<16x32xf32>
    %14 = arith.truncf %13 : vector<16x32xf32> to vector<16x32xbf16>
    %c0_13 = arith.constant 0 : index
    %c0_14 = arith.constant 0 : index
    %15 = vector.load %arg6[%c0_13, %c0_14] : memref<32x32xbf16, #tpu.memory_space<vmem>>, vector<32x32xbf16>
    %cst_15 = arith.constant dense<0.000000e+00> : vector<16x32xf32>
    %16 = tpu.matmul %8, %15, %cst_15 {dimension_numbers = #tpu.dot_dimension_numbers<[1], [0], [0], [1], [0, 0, 1, 1], [], []>} : vector<16x32xbf16>, vector<32x32xbf16>, vector<16x32xf32> -> vector<16x32xf32>
    %17 = arith.truncf %16 : vector<16x32xf32> to vector<16x32xbf16>
    %18 = vector.shape_cast %11 : vector<16x32xbf16> to vector<2x8x32xbf16>
    %19 = vector.shape_cast %14 : vector<16x32xbf16> to vector<2x8x32xbf16>
    %20 = vector.shape_cast %17 : vector<16x32xbf16> to vector<2x8x32xbf16>
    %21 = vector.extract_strided_slice %18 {offsets = [0, 0, 0], sizes = [2, 8, 16], strides = [1, 1, 1]} : vector<2x8x32xbf16> to vector<2x8x16xbf16>
    %22 = vector.extract_strided_slice %19 {offsets = [0, 0, 0], sizes = [2, 8, 16], strides = [1, 1, 1]} : vector<2x8x32xbf16> to vector<2x8x16xbf16>
    %23 = vector.extract_strided_slice %20 {offsets = [0, 0, 0], sizes = [2, 8, 16], strides = [1, 1, 1]} : vector<2x8x32xbf16> to vector<2x8x16xbf16>
    %cst_16 = arith.constant dense<0.000000e+00> : vector<2x8x8xf32>
    %24 = tpu.matmul %21, %22, %cst_16 {dimension_numbers = #tpu.dot_dimension_numbers<[2], [2], [1], [1], [0, 0, 0, 1, 1, 1], [0], [0]>} : vector<2x8x16xbf16>, vector<2x8x16xbf16>, vector<2x8x8xf32> -> vector<2x8x8xf32>
    %cst_17 = arith.constant dense<0xFF800000> : vector<2x8xf32>
    %25 = vector.multi_reduction <maximumf>, %24, %cst_17 [2] : vector<2x8x8xf32> to vector<2x8xf32>
    %26 = vector.shape_cast %25 : vector<2x8xf32> to vector<2x8x1xf32>
    %27 = vector.broadcast %26 : vector<2x8x1xf32> to vector<2x8x8xf32>
    %28 = arith.subf %24, %27 : vector<2x8x8xf32>
    %29 = math.exp %28 : vector<2x8x8xf32>
    %cst_18 = arith.constant dense<0.000000e+00> : vector<2x8xf32>
    %30 = vector.multi_reduction <add>, %29, %cst_18 [2] : vector<2x8x8xf32> to vector<2x8xf32>
    %31 = vector.shape_cast %30 : vector<2x8xf32> to vector<2x8x1xf32>
    %32 = tpu.reciprocal %31 {approx = true} : vector<2x8x1xf32> -> vector<2x8x1xf32>
    %33 = vector.broadcast %32 : vector<2x8x1xf32> to vector<2x8x8xf32>
    %34 = arith.mulf %29, %33 : vector<2x8x8xf32>
    %35 = arith.truncf %34 : vector<2x8x8xf32> to vector<2x8x8xbf16>
    %cst_19 = arith.constant dense<0.000000e+00> : vector<2x8x16xf32>
    %36 = tpu.matmul %35, %23, %cst_19 {dimension_numbers = #tpu.dot_dimension_numbers<[2], [1], [1], [2], [0, 0, 0, 1, 1, 2], [0], [0]>} : vector<2x8x8xbf16>, vector<2x8x16xbf16>, vector<2x8x16xf32> -> vector<2x8x16xf32>
    %37 = arith.truncf %36 : vector<2x8x16xf32> to vector<2x8x16xbf16>
    %38 = vector.extract_strided_slice %18 {offsets = [0, 0, 16], sizes = [2, 8, 16], strides = [1, 1, 1]} : vector<2x8x32xbf16> to vector<2x8x16xbf16>
    %39 = vector.extract_strided_slice %19 {offsets = [0, 0, 16], sizes = [2, 8, 16], strides = [1, 1, 1]} : vector<2x8x32xbf16> to vector<2x8x16xbf16>
    %40 = vector.extract_strided_slice %20 {offsets = [0, 0, 16], sizes = [2, 8, 16], strides = [1, 1, 1]} : vector<2x8x32xbf16> to vector<2x8x16xbf16>
    %cst_20 = arith.constant dense<0.000000e+00> : vector<2x8x8xf32>
    %41 = tpu.matmul %38, %39, %cst_20 {dimension_numbers = #tpu.dot_dimension_numbers<[2], [2], [1], [1], [0, 0, 0, 1, 1, 1], [0], [0]>} : vector<2x8x16xbf16>, vector<2x8x16xbf16>, vector<2x8x8xf32> -> vector<2x8x8xf32>
    %cst_21 = arith.constant dense<0xFF800000> : vector<2x8xf32>
    %42 = vector.multi_reduction <maximumf>, %41, %cst_21 [2] : vector<2x8x8xf32> to vector<2x8xf32>
    %43 = vector.shape_cast %42 : vector<2x8xf32> to vector<2x8x1xf32>
    %44 = vector.broadcast %43 : vector<2x8x1xf32> to vector<2x8x8xf32>
    %45 = arith.subf %41, %44 : vector<2x8x8xf32>
    %46 = math.exp %45 : vector<2x8x8xf32>
    %cst_22 = arith.constant dense<0.000000e+00> : vector<2x8xf32>
    %47 = vector.multi_reduction <add>, %46, %cst_22 [2] : vector<2x8x8xf32> to vector<2x8xf32>
    %48 = vector.shape_cast %47 : vector<2x8xf32> to vector<2x8x1xf32>
    %49 = tpu.reciprocal %48 {approx = true} : vector<2x8x1xf32> -> vector<2x8x1xf32>
    %50 = vector.broadcast %49 : vector<2x8x1xf32> to vector<2x8x8xf32>
    %51 = arith.mulf %46, %50 : vector<2x8x8xf32>
    %52 = arith.truncf %51 : vector<2x8x8xf32> to vector<2x8x8xbf16>
    %cst_23 = arith.constant dense<0.000000e+00> : vector<2x8x16xf32>
    %53 = tpu.matmul %52, %40, %cst_23 {dimension_numbers = #tpu.dot_dimension_numbers<[2], [1], [1], [2], [0, 0, 0, 1, 1, 2], [0], [0]>} : vector<2x8x8xbf16>, vector<2x8x16xbf16>, vector<2x8x16xf32> -> vector<2x8x16xf32>
    %54 = arith.truncf %53 : vector<2x8x16xf32> to vector<2x8x16xbf16>
    %55 = tpu.concatenate %37, %54 in 2 : vector<2x8x16xbf16>, vector<2x8x16xbf16> -> vector<2x8x32xbf16>
    %56 = vector.shape_cast %55 : vector<2x8x32xbf16> to vector<16x32xbf16>
    %c0_24 = arith.constant 0 : index
    %c0_25 = arith.constant 0 : index
    %57 = vector.load %arg7[%c0_24, %c0_25] : memref<32x32xbf16, #tpu.memory_space<vmem>>, vector<32x32xbf16>
    %cst_26 = arith.constant dense<0.000000e+00> : vector<16x32xf32>
    %58 = tpu.matmul %56, %57, %cst_26 {dimension_numbers = #tpu.dot_dimension_numbers<[1], [0], [0], [1], [0, 0, 1, 1], [], []>} : vector<16x32xbf16>, vector<32x32xbf16>, vector<16x32xf32> -> vector<16x32xf32>
    %59 = vector.shape_cast %58 : vector<16x32xf32> to vector<2x8x32xf32>
    %60 = arith.addf %59, %0 : vector<2x8x32xf32>
    %c0_27 = arith.constant 0 : index
    %c0_28 = arith.constant 0 : index
    %c0_29 = arith.constant 0 : index
    %61 = vector.load %arg8[%c0_27, %c0_28, %c0_29] : memref<2x8x32xf32, #tpu.memory_space<vmem>>, vector<2x8x32xf32>
    tpu.vector_store %arg8[%c0_27, %c0_28, %c0_29], %60 {strides = array<i32>} : memref<2x8x32xf32, #tpu.memory_space<vmem>>, vector<2x8x32xf32>,
    return
  }
  func.func @transform_0(%arg0: i32) -> (i32, i32, i32) {
    %c0_i32 = arith.constant 0 : i32
    %c0_i32_0 = arith.constant 0 : i32
    %c0_i32_1 = arith.constant 0 : i32
    return %arg0, %c0_i32, %c0_i32_0 : i32, i32, i32
  }
  func.func @transform_1(%arg0: i32) -> (i32, i32, i32) {
    %c0_i32 = arith.constant 0 : i32
    %c0_i32_0 = arith.constant 0 : i32
    %c0_i32_1 = arith.constant 0 : i32
    return %arg0, %c0_i32, %c0_i32_0 : i32, i32, i32
  }
  func.func @transform_2(%arg0: i32) -> (i32, i32, i32) {
    %c0_i32 = arith.constant 0 : i32
    %c0_i32_0 = arith.constant 0 : i32
    %c0_i32_1 = arith.constant 0 : i32
    return %arg0, %c0_i32, %c0_i32_0 : i32, i32, i32
  }
  func.func @transform_3(%arg0: i32) -> (i32, i32) {
    %c0_i32 = arith.constant 0 : i32
    %c0_i32_0 = arith.constant 0 : i32
    %c0_i32_1 = arith.constant 0 : i32
    return %c0_i32, %c0_i32_0 : i32, i32
  }
  func.func @transform_4(%arg0: i32) -> (i32, i32) {
    %c0_i32 = arith.constant 0 : i32
    %c0_i32_0 = arith.constant 0 : i32
    %c0_i32_1 = arith.constant 0 : i32
    return %c0_i32, %c0_i32_0 : i32, i32
  }
  func.func @transform_5(%arg0: i32) -> (i32, i32) {
    %c0_i32 = arith.constant 0 : i32
    %c0_i32_0 = arith.constant 0 : i32
    %c0_i32_1 = arith.constant 0 : i32
    return %c0_i32, %c0_i32_0 : i32, i32
  }
  func.func @transform_6(%arg0: i32) -> (i32, i32) {
    %c0_i32 = arith.constant 0 : i32
    %c0_i32_0 = arith.constant 0 : i32
    %c0_i32_1 = arith.constant 0 : i32
    return %c0_i32, %c0_i32_0 : i32, i32
  }
  func.func @transform_7(%arg0: i32) -> (i32, i32, i32) {
    %c0_i32 = arith.constant 0 : i32
    %c0_i32_0 = arith.constant 0 : i32
    %c0_i32_1 = arith.constant 0 : i32
    return %arg0, %c0_i32, %c0_i32_0 : i32, i32, i32
  }
}

</mosaic_0001>

<llo_original>
// kernel: tpu_custom_call.1
$region0: #{tpu_custom_call.1}
  #allocation0 [shape = 'u32[]', space=smem, size = 0x4, offset = 0x4, fixed_abs, tag = 'smem constant byte address 0x4 - core index']
  #allocation1 [shape = 'u32[72,128]{1,0:T(1,128)}', space=vmem, size = 0x9000, scoped, tag = 'internal scratch']
  %s0 = inlined_call_operand.hbm [shape: f32[2,8,32], index: 0, kind: input, shape index: {}]
  %s1 = inlined_call_operand.hbm [shape: f32[2,8,32], index: 1, kind: input, shape index: {}]
  %s2 = inlined_call_operand.hbm [shape: f32[2,8,32], index: 2, kind: input, shape index: {}]
  %s3 = inlined_call_operand.hbm [shape: bf16[32,32], index: 3, kind: input, shape index: {}]
  %s4 = inlined_call_operand.hbm [shape: bf16[32,32], index: 4, kind: input, shape index: {}]
  %s5 = inlined_call_operand.hbm [shape: bf16[32,32], index: 5, kind: input, shape index: {}]
  %s6 = inlined_call_operand.hbm [shape: bf16[32,32], index: 6, kind: input, shape index: {}]
  %s7 = inlined_call_operand.hbm [shape: f32[2,8,32], index: 7, kind: output, shape index: {}]
  %s8 = sld [smem:[#allocation0]]
  $region66: #{tpu_custom_call.1} parent=0
    _
  %s10 = ssub.s32 1, %s8
  %s11 = scalar_select 0, %s10, %s8
  $region1: #{tpu_custom_call.1} parent=0
    #allocation2 [shape = 'u8[8192]{0}', space=vmem, size = 0x2000, scoped, tag = 'input window, operand 0, single buffered']
    #allocation3 [shape = 's32[1]{0}', space=sflag, size = 0x4, scoped, tag = 'scoped memory for tpu_custom_call.1']
    #allocation4 [shape = 's32[1]{0}', space=sflag, size = 0x4, scoped, tag = 'scoped memory for tpu_custom_call.1']
    #allocation5 [shape = 'u8[8192]{0}', space=vmem, size = 0x2000, scoped, tag = 'input window, operand 1, single buffered']
    #allocation6 [shape = 's32[1]{0}', space=sflag, size = 0x4, scoped, tag = 'scoped memory for tpu_custom_call.1']
    #allocation7 [shape = 'u8[8192]{0}', space=vmem, size = 0x2000, scoped, tag = 'input window, operand 2, single buffered']
    #allocation8 [shape = 'u8[8192]{0}', space=vmem, size = 0x2000, scoped, tag = 'input window, operand 3, single buffered']
    #allocation9 [shape = 's32[1]{0}', space=sflag, size = 0x4, scoped, tag = 'scoped memory for tpu_custom_call.1']
    #allocation10 [shape = 'u8[8192]{0}', space=vmem, size = 0x2000, scoped, tag = 'input window, operand 4, single buffered']
    #allocation11 [shape = 'u8[8192]{0}', space=vmem, size = 0x2000, scoped, tag = 'input window, operand 5, single buffered']
    #allocation12 [shape = 's32[1]{0}', space=sflag, size = 0x4, scoped, tag = 'scoped memory for tpu_custom_call.1']
    #allocation13 [shape = 'u8[8192]{0}', space=vmem, size = 0x2000, scoped, tag = 'input window, operand 6, single buffered']
    #allocation14 [shape = 'u8[8192]{0}', space=vmem, size = 0x2000, scoped, tag = 'output window, operand 0, single buffered']
    %12 = vsyncpa [#allocation3], 0
    %13 = vsyncpa [#allocation6], 0
    %14 = vsyncpa [#allocation9], 0
    %15 = vsyncpa [#allocation12], 0
    %16 = vsyncpa [#allocation4], 0
    // Predicated region
    $region2: #{tpu_custom_call.1} parent=1 // pred_check
      _
    $region3: #{tpu_custom_call.1} parent=1 // pred_check_branch
      %18 = sbr.rel (0) target = $region5
    $region4: #{tpu_custom_call.1} parent=1 // pred_region
      %20 = vsyncadd [#allocation3], 0
      %s21 = sshll.u32 %s0, 4
      %s22 = int_to_ptr.hbm [resolvable:$true] %s21
      %s23 = sshll.u32 [#allocation2], 4
      %s24 = int_to_ptr.vmem [resolvable:$true] %s23
      %29 = dma.hbm_to_vmem [thread:$0]  %s22, 256, %s24, [#allocation3], 128, 128, 8
    $region5: #{tpu_custom_call.1} parent=1 // pred_fallthru
      _
    // Predicated region
    $region6: #{tpu_custom_call.1} parent=1 // pred_check
      _
    $region7: #{tpu_custom_call.1} parent=1 // pred_check_branch
      %31 = sbr.rel (0) target = $region9
    $region8: #{tpu_custom_call.1} parent=1 // pred_region
      %33 = vsyncadd [#allocation6], 0
      %s34 = sshll.u32 %s1, 4
      %s35 = int_to_ptr.hbm [resolvable:$true] %s34
      %s36 = sshll.u32 [#allocation5], 4
      %s37 = int_to_ptr.vmem [resolvable:$true] %s36
      %42 = dma.hbm_to_vmem [thread:$0]  %s35, 256, %s37, [#allocation6], 128, 128, 8
    $region9: #{tpu_custom_call.1} parent=1 // pred_fallthru
      _
    // Predicated region
    $region10: #{tpu_custom_call.1} parent=1 // pred_check
      _
    $region11: #{tpu_custom_call.1} parent=1 // pred_check_branch
      %44 = sbr.rel (0) target = $region13
    $region12: #{tpu_custom_call.1} parent=1 // pred_region
      %46 = vsyncadd [#allocation6], 0
      %s47 = sshll.u32 %s2, 4
      %s48 = int_to_ptr.hbm [resolvable:$true] %s47
      %s49 = sshll.u32 [#allocation7], 4
      %s50 = int_to_ptr.vmem [resolvable:$true] %s49
      %55 = dma.hbm_to_vmem [thread:$0]  %s48, 256, %s50, [#allocation6], 128, 128, 8
    $region13: #{tpu_custom_call.1} parent=1 // pred_fallthru
      _
    // Predicated region
    $region14: #{tpu_custom_call.1} parent=1 // pred_check
      _
    $region15: #{tpu_custom_call.1} parent=1 // pred_check_branch
      %57 = sbr.rel (0) target = $region17
    $region16: #{tpu_custom_call.1} parent=1 // pred_region
      %59 = vsyncadd [#allocation9], 0
      %s60 = sshll.u32 %s3, 4
      %s61 = int_to_ptr.hbm [resolvable:$true] %s60
      %s62 = sshll.u32 [#allocation8], 4
      %s63 = int_to_ptr.vmem [resolvable:$true] %s62
      %68 = dma.hbm_to_vmem [thread:$0]  %s61, 256, %s63, [#allocation9], 64, 64, 4
    $region17: #{tpu_custom_call.1} parent=1 // pred_fallthru
      _
    // Predicated region
    $region18: #{tpu_custom_call.1} parent=1 // pred_check
      _
    $region19: #{tpu_custom_call.1} parent=1 // pred_check_branch
      %70 = sbr.rel (0) target = $region21
    $region20: #{tpu_custom_call.1} parent=1 // pred_region
      %72 = vsyncadd [#allocation9], 0
      %s73 = sshll.u32 %s4, 4
      %s74 = int_to_ptr.hbm [resolvable:$true] %s73
      %s75 = sshll.u32 [#allocation10], 4
      %s76 = int_to_ptr.vmem [resolvable:$true] %s75
      %81 = dma.hbm_to_vmem [thread:$0]  %s74, 256, %s76, [#allocation9], 64, 64, 4
    $region21: #{tpu_custom_call.1} parent=1 // pred_fallthru
      _
    // Predicated region
    $region22: #{tpu_custom_call.1} parent=1 // pred_check
      _
    $region23: #{tpu_custom_call.1} parent=1 // pred_check_branch
      %83 = sbr.rel (0) target = $region25
    $region24: #{tpu_custom_call.1} parent=1 // pred_region
      %85 = vsyncadd [#allocation12], 0
      %s86 = sshll.u32 %s5, 4
      %s87 = int_to_ptr.hbm [resolvable:$true] %s86
      %s88 = sshll.u32 [#allocation11], 4
      %s89 = int_to_ptr.vmem [resolvable:$true] %s88
      %94 = dma.hbm_to_vmem [thread:$0]  %s87, 256, %s89, [#allocation12], 64, 64, 4
    $region25: #{tpu_custom_call.1} parent=1 // pred_fallthru
      _
    // Predicated region
    $region26: #{tpu_custom_call.1} parent=1 // pred_check
      _
    $region27: #{tpu_custom_call.1} parent=1 // pred_check_branch
      %96 = sbr.rel (0) target = $region29
    $region28: #{tpu_custom_call.1} parent=1 // pred_region
      %98 = vsyncadd [#allocation12], 0
      %s99 = sshll.u32 %s6, 4
      %s100 = int_to_ptr.hbm [resolvable:$true] %s99
      %s101 = sshll.u32 [#allocation13], 4
      %s102 = int_to_ptr.vmem [resolvable:$true] %s101
      %107 = dma.hbm_to_vmem [thread:$0]  %s100, 256, %s102, [#allocation12], 64, 64, 4
    $region29: #{tpu_custom_call.1} parent=1 // pred_fallthru
      _
    // Predicated region
    $region30: #{tpu_custom_call.1} parent=1 // pred_check
      _
    $region31: #{tpu_custom_call.1} parent=1 // pred_check_branch
      %109 = sbr.rel (0) target = $region33
    $region32: #{tpu_custom_call.1} parent=1 // pred_region
      %111 = dma.done [#allocation3], 256
    $region33: #{tpu_custom_call.1} parent=1 // pred_fallthru
      _
    // Predicated region
    $region34: #{tpu_custom_call.1} parent=1 // pred_check
      _
    $region35: #{tpu_custom_call.1} parent=1 // pred_check_branch
      %113 = sbr.rel (0) target = $region37
    $region36: #{tpu_custom_call.1} parent=1 // pred_region
      %115 = dma.done [#allocation6], 256
    $region37: #{tpu_custom_call.1} parent=1 // pred_fallthru
      _
    // Predicated region
    $region38: #{tpu_custom_call.1} parent=1 // pred_check
      _
    $region39: #{tpu_custom_call.1} parent=1 // pred_check_branch
      %117 = sbr.rel (0) target = $region41
    $region40: #{tpu_custom_call.1} parent=1 // pred_region
      %119 = dma.done [#allocation6], 256
    $region41: #{tpu_custom_call.1} parent=1 // pred_fallthru
      _
    // Predicated region
    $region42: #{tpu_custom_call.1} parent=1 // pred_check
      _
    $region43: #{tpu_custom_call.1} parent=1 // pred_check_branch
      %121 = sbr.rel (0) target = $region45
    $region44: #{tpu_custom_call.1} parent=1 // pred_region
      %123 = dma.done [#allocation9], 256
    $region45: #{tpu_custom_call.1} parent=1 // pred_fallthru
      _
    // Predicated region
    $region46: #{tpu_custom_call.1} parent=1 // pred_check
      _
    $region47: #{tpu_custom_call.1} parent=1 // pred_check_branch
      %125 = sbr.rel (0) target = $region49
    $region48: #{tpu_custom_call.1} parent=1 // pred_region
      %127 = dma.done [#allocation9], 256
    $region49: #{tpu_custom_call.1} parent=1 // pred_fallthru
      _
    // Predicated region
    $region50: #{tpu_custom_call.1} parent=1 // pred_check
      _
    $region51: #{tpu_custom_call.1} parent=1 // pred_check_branch
      %129 = sbr.rel (0) target = $region53
    $region52: #{tpu_custom_call.1} parent=1 // pred_region
      %131 = dma.done [#allocation12], 256
    $region53: #{tpu_custom_call.1} parent=1 // pred_fallthru
      _
    // Predicated region
    $region54: #{tpu_custom_call.1} parent=1 // pred_check
      _
    $region55: #{tpu_custom_call.1} parent=1 // pred_check_branch
      %133 = sbr.rel (0) target = $region57
    $region56: #{tpu_custom_call.1} parent=1 // pred_region
      %135 = dma.done [#allocation12], 256
    $region57: #{tpu_custom_call.1} parent=1 // pred_fallthru
      _
    %v137 = vld [vmem:[#allocation2] sm:$0xff]
    %v138 = vld [vmem:[#allocation2 + $0x8] sm:$0xff]
    %v139 = vpack.c.bf16 %v138, %v137
    %v140 = vld [vmem:[#allocation5] sm:$0xff]
    %v141 = vld [vmem:[#allocation5 + $0x8] sm:$0xff]
    %v142 = vpack.c.bf16 %v141, %v140
    %v143 = vld [vmem:[#allocation7] sm:$0xff]
    %v144 = vld [vmem:[#allocation7 + $0x8] sm:$0xff]
    %v145 = vpack.c.bf16 %v144, %v143
    %v146 = vld [vmem:[#allocation8] sm:$0xf]
    %v147 = vld [vmem:[#allocation8 + $0x4] sm:$0xf]
    %v148 = vld [vmem:[#allocation8 + $0x8] sm:$0xf]
    %v149 = vld [vmem:[#allocation8 + $0xc] sm:$0xf]
    %v154 = vunpack.c.l.b16 %v146
    %v155 = vunpack.c.l.b16 %v147
    %v156 = vunpack.c.l.b16 %v148
    %v157 = vunpack.c.l.b16 %v149
    %v158 = vpack.c.b16 %v155, %v154
    %v159 = vpack.c.b16 %v157, %v156
    %vm162 = vcmask 261120
    %v164 = vsel %vm162, %v139, 0
    %166 = vmatpush.bf16.msra.mxu0 0
    %167 = vmatpush.bf16.msra.mxu0 0
    %168 = vmatpush.bf16.msra.mxu0 0
    %169 = vmatpush.bf16.msra.mxu0 0
    %170 = vmatpush.bf16.msra.mxu0 0
    %171 = vmatpush.bf16.msra.mxu0 0
    %172 = vmatpush.bf16.msra.mxu0 %v159
    %173 = vmatpush.bf16.msra.mxu0 %v158
    %174 = vmatmul.bf16.gmra.mxu0 %v164
    %v175 = vpop.f32.mrf.mxu0
    %v176 = vadd.f32 0.0, %v175
    %v177 = vpop.f32.mrf.mxu0
    %v178 = vadd.f32 0.0, %v177
    %179 = vdwg.mxu0
    %v180 = vpack.c.bf16 %v176, %v176
    %v181 = vpack.c.bf16 %v178, %v178
    %v182 = vld [vmem:[#allocation10] sm:$0xf]
    %v183 = vld [vmem:[#allocation10 + $0x4] sm:$0xf]
    %v184 = vld [vmem:[#allocation10 + $0x8] sm:$0xf]
    %v185 = vld [vmem:[#allocation10 + $0xc] sm:$0xf]
    %v190 = vunpack.c.l.b16 %v182
    %v191 = vunpack.c.l.b16 %v183
    %v192 = vunpack.c.l.b16 %v184
    %v193 = vunpack.c.l.b16 %v185
    %v194 = vpack.c.b16 %v191, %v190
    %v195 = vpack.c.b16 %v193, %v192
    %v199 = vsel %vm162, %v142, 0
    %201 = vmatpush.bf16.msra.mxu0 0
    %202 = vmatpush.bf16.msra.mxu0 0
    %203 = vmatpush.bf16.msra.mxu0 0
    %204 = vmatpush.bf16.msra.mxu0 0
    %205 = vmatpush.bf16.msra.mxu0 0
    %206 = vmatpush.bf16.msra.mxu0 0
    %207 = vmatpush.bf16.msra.mxu0 %v195
    %208 = vmatpush.bf16.msra.mxu0 %v194
    %209 = vmatmul.bf16.gmra.mxu0 %v199
    %v210 = vpop.f32.mrf.mxu0
    %v211 = vadd.f32 0.0, %v210
    %v212 = vpop.f32.mrf.mxu0
    %v213 = vadd.f32 0.0, %v212
    %214 = vdwg.mxu0
    %v215 = vpack.c.bf16 %v211, %v211
    %v216 = vpack.c.bf16 %v213, %v213
    %v217 = vld [vmem:[#allocation11] sm:$0xf]
    %v218 = vld [vmem:[#allocation11 + $0x4] sm:$0xf]
    %v219 = vld [vmem:[#allocation11 + $0x8] sm:$0xf]
    %v220 = vld [vmem:[#allocation11 + $0xc] sm:$0xf]
    %v225 = vunpack.c.l.b16 %v217
    %v226 = vunpack.c.l.b16 %v218
    %v227 = vunpack.c.l.b16 %v219
    %v228 = vunpack.c.l.b16 %v220
    %v229 = vpack.c.b16 %v226, %v225
    %v230 = vpack.c.b16 %v228, %v227
    %v234 = vsel %vm162, %v145, 0
    %236 = vmatpush.bf16.msra.mxu0 0
    %237 = vmatpush.bf16.msra.mxu0 0
    %238 = vmatpush.bf16.msra.mxu0 0
    %239 = vmatpush.bf16.msra.mxu0 0
    %240 = vmatpush.bf16.msra.mxu0 0
    %241 = vmatpush.bf16.msra.mxu0 0
    %242 = vmatpush.bf16.msra.mxu0 %v230
    %243 = vmatpush.bf16.msra.mxu0 %v229
    %244 = vmatmul.bf16.gmra.mxu0 %v234
    %v245 = vpop.f32.mrf.mxu0
    %v246 = vadd.f32 0.0, %v245
    %v247 = vpop.f32.mrf.mxu0
    %v248 = vadd.f32 0.0, %v247
    %249 = vdwg.mxu0
    %v250 = vpack.c.bf16 %v246, %v246
    %v251 = vpack.c.bf16 %v248, %v248
    %vm252 = vcmask 130048
    %v254 = vsel %vm252, %v180, 0
    %v257 = vsel %vm252, %v215, 0
    %259 = vmatpush.bf16.xpose.msra.mxu0 0
    %260 = vmatpush.bf16.xpose.msra.mxu0 0
    %261 = vmatpush.bf16.xpose.msra.mxu0 0
    %262 = vmatpush.bf16.xpose.msra.mxu0 0
    %263 = vmatpush.bf16.xpose.msra.mxu0 0
    %264 = vmatpush.bf16.xpose.msra.mxu0 0
    %265 = vmatpush.bf16.xpose.msra.mxu0 0
    %266 = vmatpush.bf16.xpose.msra.mxu0 %v257
    %267 = vmatmul.bf16.gmra.mxu0 %v254
    %v268 = vpop.f32.mrf.mxu0
    %v269 = vadd.f32 0.0, %v268
    %v270 = vpop.f32.mrf.mxu0
    %271 = vdwg.mxu0
    %v273 = vsel %vm252, %v181, 0
    %v276 = vsel %vm252, %v216, 0
    %278 = vmatpush.bf16.xpose.msra.mxu0 0
    %279 = vmatpush.bf16.xpose.msra.mxu0 0
    %280 = vmatpush.bf16.xpose.msra.mxu0 0
    %281 = vmatpush.bf16.xpose.msra.mxu0 0
    %282 = vmatpush.bf16.xpose.msra.mxu0 0
    %283 = vmatpush.bf16.xpose.msra.mxu0 0
    %284 = vmatpush.bf16.xpose.msra.mxu0 0
    %285 = vmatpush.bf16.xpose.msra.mxu0 %v276
    %286 = vmatmul.bf16.gmra.mxu0 %v273
    %v287 = vpop.f32.mrf.mxu0
    %v288 = vadd.f32 0.0, %v287
    %v289 = vpop.f32.mrf.mxu0
    %290 = vdwg.mxu0
    %vm291 = vcmask 64512
    %v292 = vsel %vm291, %v269, -inf
    %293 = vmax.xlane.f32.xlu0 %v292
    %v294 = vpop.xlane.xlu0 %293
    %v295 = vsel %vm291, %v288, -inf
    %296 = vmax.xlane.f32.xlu0 %v295
    %v297 = vpop.xlane.xlu0 %296
    %v298 = vsub.f32 %v269, %v294
    %v299 = vsub.f32 %v288, %v297
    %v300 = vmul.f32 %v298, 1.442695
    %v301 = vpow.pop %v300
    %v302 = vmul.f32 %v299, 1.442695
    %v303 = vpow.pop %v302
    %v304 = vsel %vm291, %v301, 0.0
    %305 = vadd.xlane.f32.xlu0 %v304
    %v306 = vpop.xlane.xlu0 %305
    %v307 = vsel %vm291, %v303, 0.0
    %308 = vadd.xlane.f32.xlu0 %v307
    %v309 = vpop.xlane.xlu0 %308
    %v310 = vrcp.pop %v306
    %v311 = vrcp.pop %v309
    %v312 = vmul.f32 %v301, %v310
    %v313 = vmul.f32 %v303, %v311
    %v314 = vpack.c.bf16 %v312, %v312
    %v315 = vpack.c.bf16 %v313, %v313
    %v317 = vsel %vm291, %v314, 0
    %vm319 = vcmask 1043456
    %v321 = vsel %vm319, %v250, 0
    %323 = vmatpush.bf16.msra.mxu0 0
    %324 = vmatpush.bf16.msra.mxu0 0
    %325 = vmatpush.bf16.msra.mxu0 0
    %326 = vmatpush.bf16.msra.mxu0 0
    %327 = vmatpush.bf16.msra.mxu0 0
    %328 = vmatpush.bf16.msra.mxu0 0
    %329 = vmatpush.bf16.msra.mxu0 0
    %330 = vmatpush.bf16.msra.mxu0 %v321
    %331 = vmatmul.bf16.gmra.mxu0 %v317
    %v332 = vpop.f32.mrf.mxu0
    %v333 = vadd.f32 0.0, %v332
    %v334 = vpop.f32.mrf.mxu0
    %335 = vdwg.mxu0
    %v337 = vsel %vm291, %v315, 0
    %v340 = vsel %vm319, %v251, 0
    %342 = vmatpush.bf16.msra.mxu0 0
    %343 = vmatpush.bf16.msra.mxu0 0
    %344 = vmatpush.bf16.msra.mxu0 0
    %345 = vmatpush.bf16.msra.mxu0 0
    %346 = vmatpush.bf16.msra.mxu0 0
    %347 = vmatpush.bf16.msra.mxu0 0
    %348 = vmatpush.bf16.msra.mxu0 0
    %349 = vmatpush.bf16.msra.mxu0 %v340
    %350 = vmatmul.bf16.gmra.mxu0 %v337
    %v351 = vpop.f32.mrf.mxu0
    %v352 = vadd.f32 0.0, %v351
    %v353 = vpop.f32.mrf.mxu0
    %354 = vdwg.mxu0
    %v355 = vpack.c.bf16 %v333, %v333
    %v356 = vpack.c.bf16 %v352, %v352
    %v358 = vunpack.c.l.b16 %v180
    %v359 = vpack.c.b16 %v358, %v358
    %360 = vrot.lane.b32.xlu0 %v359, 112
    %v361 = vpop.permute.xlu0 %360
    %v363 = vunpack.c.l.b16 %v215
    %v364 = vpack.c.b16 %v363, %v363
    %365 = vrot.lane.b32.xlu0 %v364, 112
    %v366 = vpop.permute.xlu0 %365
    %v368 = vsel %vm252, %v361, 0
    %v371 = vsel %vm252, %v366, 0
    %373 = vmatpush.bf16.xpose.msra.mxu0 0
    %374 = vmatpush.bf16.xpose.msra.mxu0 0
    %375 = vmatpush.bf16.xpose.msra.mxu0 0
    %376 = vmatpush.bf16.xpose.msra.mxu0 0
    %377 = vmatpush.bf16.xpose.msra.mxu0 0
    %378 = vmatpush.bf16.xpose.msra.mxu0 0
    %379 = vmatpush.bf16.xpose.msra.mxu0 0
    %380 = vmatpush.bf16.xpose.msra.mxu0 %v371
    %381 = vmatmul.bf16.gmra.mxu0 %v368
    %v382 = vpop.f32.mrf.mxu0
    %v383 = vadd.f32 0.0, %v382
    %v384 = vpop.f32.mrf.mxu0
    %385 = vdwg.mxu0
    %v387 = vunpack.c.l.b16 %v181
    %v388 = vpack.c.b16 %v387, %v387
    %389 = vrot.lane.b32.xlu0 %v388, 112
    %v390 = vpop.permute.xlu0 %389
    %v392 = vunpack.c.l.b16 %v216
    %v393 = vpack.c.b16 %v392, %v392
    %394 = vrot.lane.b32.xlu0 %v393, 112
    %v395 = vpop.permute.xlu0 %394
    %v397 = vsel %vm252, %v390, 0
    %v400 = vsel %vm252, %v395, 0
    %402 = vmatpush.bf16.xpose.msra.mxu0 0
    %403 = vmatpush.bf16.xpose.msra.mxu0 0
    %404 = vmatpush.bf16.xpose.msra.mxu0 0
    %405 = vmatpush.bf16.xpose.msra.mxu0 0
    %406 = vmatpush.bf16.xpose.msra.mxu0 0
    %407 = vmatpush.bf16.xpose.msra.mxu0 0
    %408 = vmatpush.bf16.xpose.msra.mxu0 0
    %409 = vmatpush.bf16.xpose.msra.mxu0 %v400
    %410 = vmatmul.bf16.gmra.mxu0 %v397
    %v411 = vpop.f32.mrf.mxu0
    %v412 = vadd.f32 0.0, %v411
    %v413 = vpop.f32.mrf.mxu0
    %414 = vdwg.mxu0
    %v415 = vsel %vm291, %v383, -inf
    %416 = vmax.xlane.f32.xlu0 %v415
    %v417 = vpop.xlane.xlu0 %416
    %v418 = vsel %vm291, %v412, -inf
    %419 = vmax.xlane.f32.xlu0 %v418
    %v420 = vpop.xlane.xlu0 %419
    %v421 = vsub.f32 %v383, %v417
    %v422 = vsub.f32 %v412, %v420
    %v423 = vmul.f32 %v421, 1.442695
    %v424 = vpow.pop %v423
    %v425 = vmul.f32 %v422, 1.442695
    %v426 = vpow.pop %v425
    %v427 = vsel %vm291, %v424, 0.0
    %428 = vadd.xlane.f32.xlu0 %v427
    %v429 = vpop.xlane.xlu0 %428
    %v430 = vsel %vm291, %v426, 0.0
    %431 = vadd.xlane.f32.xlu0 %v430
    %v432 = vpop.xlane.xlu0 %431
    %v433 = vrcp.pop %v429
    %v434 = vrcp.pop %v432
    %v435 = vmul.f32 %v424, %v433
    %v436 = vmul.f32 %v426, %v434
    %v437 = vpack.c.bf16 %v435, %v435
    %v438 = vpack.c.bf16 %v436, %v436
    %v440 = vunpack.c.l.b16 %v250
    %v441 = vpack.c.b16 %v440, %v440
    %442 = vrot.lane.b32.xlu0 %v441, 112
    %v443 = vpop.permute.xlu0 %442
    %v445 = vsel %vm291, %v437, 0
    %v448 = vsel %vm319, %v443, 0
    %450 = vmatpush.bf16.msra.mxu0 0
    %451 = vmatpush.bf16.msra.mxu0 0
    %452 = vmatpush.bf16.msra.mxu0 0
    %453 = vmatpush.bf16.msra.mxu0 0
    %454 = vmatpush.bf16.msra.mxu0 0
    %455 = vmatpush.bf16.msra.mxu0 0
    %456 = vmatpush.bf16.msra.mxu0 0
    %457 = vmatpush.bf16.msra.mxu0 %v448
    %458 = vmatmul.bf16.gmra.mxu0 %v445
    %v459 = vpop.f32.mrf.mxu0
    %v460 = vadd.f32 0.0, %v459
    %v461 = vpop.f32.mrf.mxu0
    %462 = vdwg.mxu0
    %v464 = vunpack.c.l.b16 %v251
    %v465 = vpack.c.b16 %v464, %v464
    %466 = vrot.lane.b32.xlu0 %v465, 112
    %v467 = vpop.permute.xlu0 %466
    %v469 = vsel %vm291, %v438, 0
    %v472 = vsel %vm319, %v467, 0
    %474 = vmatpush.bf16.msra.mxu0 0
    %475 = vmatpush.bf16.msra.mxu0 0
    %476 = vmatpush.bf16.msra.mxu0 0
    %477 = vmatpush.bf16.msra.mxu0 0
    %478 = vmatpush.bf16.msra.mxu0 0
    %479 = vmatpush.bf16.msra.mxu0 0
    %480 = vmatpush.bf16.msra.mxu0 0
    %481 = vmatpush.bf16.msra.mxu0 %v472
    %482 = vmatmul.bf16.gmra.mxu0 %v469
    %v483 = vpop.f32.mrf.mxu0
    %v484 = vadd.f32 0.0, %v483
    %v485 = vpop.f32.mrf.mxu0
    %486 = vdwg.mxu0
    %v487 = vpack.c.bf16 %v460, %v460
    %v488 = vpack.c.bf16 %v484, %v484
    %v491 = vunpack.c.l.b16 %v487
    %v492 = vunpack.c.l.b16 %v488
    %v493 = vpack.c.b16 %v491, %v491
    %v494 = vpack.c.b16 %v492, %v492
    %495 = vrot.lane.b32.xlu0 %v493, 16
    %v496 = vpop.permute.xlu0 %495
    %497 = vrot.lane.b32.xlu0 %v494, 16
    %v498 = vpop.permute.xlu0 %497
    %v501 = vsel %vm252, %v355, %v496
    %v504 = vsel %vm252, %v356, %v498
    %v505 = vld [vmem:[#allocation13] sm:$0xf]
    %v506 = vld [vmem:[#allocation13 + $0x4] sm:$0xf]
    %v507 = vld [vmem:[#allocation13 + $0x8] sm:$0xf]
    %v508 = vld [vmem:[#allocation13 + $0xc] sm:$0xf]
    %v511 = vunpack.c.l.b16 %v501
    %v512 = vunpack.c.l.b16 %v504
    %v513 = vpack.c.b16 %v512, %v511
    %v518 = vunpack.c.l.b16 %v505
    %v519 = vunpack.c.l.b16 %v506
    %v520 = vunpack.c.l.b16 %v507
    %v521 = vunpack.c.l.b16 %v508
    %v522 = vpack.c.b16 %v519, %v518
    %v523 = vpack.c.b16 %v521, %v520
    %v527 = vsel %vm162, %v513, 0
    %529 = vmatpush.bf16.msra.mxu0 0
    %530 = vmatpush.bf16.msra.mxu0 0
    %531 = vmatpush.bf16.msra.mxu0 0
    %532 = vmatpush.bf16.msra.mxu0 0
    %533 = vmatpush.bf16.msra.mxu0 0
    %534 = vmatpush.bf16.msra.mxu0 0
    %535 = vmatpush.bf16.msra.mxu0 %v523
    %536 = vmatpush.bf16.msra.mxu0 %v522
    %537 = vmatmul.bf16.gmra.mxu0 %v527
    %v538 = vpop.f32.mrf.mxu0
    %v539 = vadd.f32 0.0, %v538
    %v540 = vpop.f32.mrf.mxu0
    %v541 = vadd.f32 0.0, %v540
    %542 = vdwg.mxu0
    %v543 = vadd.f32 %v539, %v137
    %v544 = vadd.f32 %v541, %v138
    %545 = vst.msk [vmem:[#allocation14] sm:$0xff] %vm162, %v543
    %546 = vst.msk [vmem:[#allocation14 + $0x8] sm:$0xff] %vm162, %v544
    // Predicated region
    $region58: #{tpu_custom_call.1} parent=1 // pred_check
      _
    $region59: #{tpu_custom_call.1} parent=1 // pred_check_branch
      %548 = sbr.rel (0) target = $region61
    $region60: #{tpu_custom_call.1} parent=1 // pred_region
      %550 = vsyncadd [#allocation4], 0
      %s551 = sshll.u32 [#allocation14], 4
      %s552 = int_to_ptr.vmem [resolvable:$true] %s551
      %s553 = sshll.u32 %s7, 4
      %s554 = int_to_ptr.hbm [resolvable:$true] %s553
      %559 = dma.vmem_to_hbm [thread:$0]  %s552, 256, %s554, [#allocation4], 128, 128, 8
    $region61: #{tpu_custom_call.1} parent=1 // pred_fallthru
      _
    // Predicated region
    $region62: #{tpu_custom_call.1} parent=1 // pred_check
      _
    $region63: #{tpu_custom_call.1} parent=1 // pred_check_branch
      %561 = sbr.rel (0) target = $region65
    $region64: #{tpu_custom_call.1} parent=1 // pred_region
      %563 = dma.done [#allocation4], 256
    $region65: #{tpu_custom_call.1} parent=1 // pred_fallthru
      _
    %564 = vsyncpa [#allocation3], 1
    %565 = vsyncpa [#allocation6], 1
    %566 = vsyncpa [#allocation9], 1
    %567 = vsyncpa [#allocation12], 1
    %568 = vsyncpa [#allocation4], 1

// kernel: tpu_custom_call.1
$region0: #{tpu_custom_call.1}
  #allocation0 [shape = 'u32[]', space=smem, size = 0x4, offset = 0x4, fixed_abs, tag = 'smem constant byte address 0x4 - core index']
  #allocation1 [shape = 'u32[72,128]{1,0:T(1,128)}', space=vmem, size = 0x9000, scoped, tag = 'internal scratch']
  %s0 = inlined_call_operand.hbm [shape: f32[2,8,32], index: 0, kind: input, shape index: {}]
  %s1 = inlined_call_operand.hbm [shape: f32[2,8,32], index: 1, kind: input, shape index: {}]
  %s2 = inlined_call_operand.hbm [shape: f32[2,8,32], index: 2, kind: input, shape index: {}]
  %s3 = inlined_call_operand.hbm [shape: bf16[32,32], index: 3, kind: input, shape index: {}]
  %s4 = inlined_call_operand.hbm [shape: bf16[32,32], index: 4, kind: input, shape index: {}]
  %s5 = inlined_call_operand.hbm [shape: bf16[32,32], index: 5, kind: input, shape index: {}]
  %s6 = inlined_call_operand.hbm [shape: bf16[32,32], index: 6, kind: input, shape index: {}]
  %s7 = inlined_call_operand.hbm [shape: f32[2,8,32], index: 7, kind: output, shape index: {}]
  %s8 = sld [smem:[#allocation0]]
  $region66: #{tpu_custom_call.1} parent=0
    _
  %s10 = ssub.s32 1, %s8
  %s11 = scalar_select 0, %s10, %s8
  $region1: #{tpu_custom_call.1} parent=0
    #allocation2 [shape = 'u8[8192]{0}', space=vmem, size = 0x2000, scoped, tag = 'input window, operand 0, single buffered']
    #allocation3 [shape = 's32[1]{0}', space=sflag, size = 0x4, scoped, tag = 'scoped memory for tpu_custom_call.1']
    #allocation4 [shape = 's32[1]{0}', space=sflag, size = 0x4, scoped, tag = 'scoped memory for tpu_custom_call.1']
    #allocation5 [shape = 'u8[8192]{0}', space=vmem, size = 0x2000, scoped, tag = 'input window, operand 1, single buffered']
    #allocation6 [shape = 's32[1]{0}', space=sflag, size = 0x4, scoped, tag = 'scoped memory for tpu_custom_call.1']
    #allocation7 [shape = 'u8[8192]{0}', space=vmem, size = 0x2000, scoped, tag = 'input window, operand 2, single buffered']
    #allocation8 [shape = 'u8[8192]{0}', space=vmem, size = 0x2000, scoped, tag = 'input window, operand 3, single buffered']
    #allocation9 [shape = 's32[1]{0}', space=sflag, size = 0x4, scoped, tag = 'scoped memory for tpu_custom_call.1']
    #allocation10 [shape = 'u8[8192]{0}', space=vmem, size = 0x2000, scoped, tag = 'input window, operand 4, single buffered']
    #allocation11 [shape = 'u8[8192]{0}', space=vmem, size = 0x2000, scoped, tag = 'input window, operand 5, single buffered']
    #allocation12 [shape = 's32[1]{0}', space=sflag, size = 0x4, scoped, tag = 'scoped memory for tpu_custom_call.1']
    #allocation13 [shape = 'u8[8192]{0}', space=vmem, size = 0x2000, scoped, tag = 'input window, operand 6, single buffered']
    #allocation14 [shape = 'u8[8192]{0}', space=vmem, size = 0x2000, scoped, tag = 'output window, operand 0, single buffered']
    %12 = vsyncpa [#allocation3], 0
    %13 = vsyncpa [#allocation6], 0
    %14 = vsyncpa [#allocation9], 0
    %15 = vsyncpa [#allocation12], 0
    %16 = vsyncpa [#allocation4], 0
    // Predicated region
    $region2: #{tpu_custom_call.1} parent=1 // pred_check
      _
    $region3: #{tpu_custom_call.1} parent=1 // pred_check_branch
      %18 = sbr.rel (0) target = $region5
    $region4: #{tpu_custom_call.1} parent=1 // pred_region
      %20 = vsyncadd [#allocation3], 0
      %s21 = sshll.u32 %s0, 4
      %s22 = int_to_ptr.hbm [resolvable:$true] %s21
      %s23 = sshll.u32 [#allocation2], 4
      %s24 = int_to_ptr.vmem [resolvable:$true] %s23
      %29 = dma.hbm_to_vmem [thread:$0]  %s22, 256, %s24, [#allocation3], 128, 128, 8
    $region5: #{tpu_custom_call.1} parent=1 // pred_fallthru
      _
    // Predicated region
    $region6: #{tpu_custom_call.1} parent=1 // pred_check
      _
    $region7: #{tpu_custom_call.1} parent=1 // pred_check_branch
      %31 = sbr.rel (0) target = $region9
    $region8: #{tpu_custom_call.1} parent=1 // pred_region
      %33 = vsyncadd [#allocation6], 0
      %s34 = sshll.u32 %s1, 4
      %s35 = int_to_ptr.hbm [resolvable:$true] %s34
      %s36 = sshll.u32 [#allocation5], 4
      %s37 = int_to_ptr.vmem [resolvable:$true] %s36
      %42 = dma.hbm_to_vmem [thread:$0]  %s35, 256, %s37, [#allocation6], 128, 128, 8
    $region9: #{tpu_custom_call.1} parent=1 // pred_fallthru
      _
    // Predicated region
    $region10: #{tpu_custom_call.1} parent=1 // pred_check
      _
    $region11: #{tpu_custom_call.1} parent=1 // pred_check_branch
      %44 = sbr.rel (0) target = $region13
    $region12: #{tpu_custom_call.1} parent=1 // pred_region
      %46 = vsyncadd [#allocation6], 0
      %s47 = sshll.u32 %s2, 4
      %s48 = int_to_ptr.hbm [resolvable:$true] %s47
      %s49 = sshll.u32 [#allocation7], 4
      %s50 = int_to_ptr.vmem [resolvable:$true] %s49
      %55 = dma.hbm_to_vmem [thread:$0]  %s48, 256, %s50, [#allocation6], 128, 128, 8
    $region13: #{tpu_custom_call.1} parent=1 // pred_fallthru
      _
    // Predicated region
    $region14: #{tpu_custom_call.1} parent=1 // pred_check
      _
    $region15: #{tpu_custom_call.1} parent=1 // pred_check_branch
      %57 = sbr.rel (0) target = $region17
    $region16: #{tpu_custom_call.1} parent=1 // pred_region
      %59 = vsyncadd [#allocation9], 0
      %s60 = sshll.u32 %s3, 4
      %s61 = int_to_ptr.hbm [resolvable:$true] %s60
      %s62 = sshll.u32 [#allocation8], 4
      %s63 = int_to_ptr.vmem [resolvable:$true] %s62
      %68 = dma.hbm_to_vmem [thread:$0]  %s61, 256, %s63, [#allocation9], 64, 64, 4
    $region17: #{tpu_custom_call.1} parent=1 // pred_fallthru
      _
    // Predicated region
    $region18: #{tpu_custom_call.1} parent=1 // pred_check
      _
    $region19: #{tpu_custom_call.1} parent=1 // pred_check_branch
      %70 = sbr.rel (0) target = $region21
    $region20: #{tpu_custom_call.1} parent=1 // pred_region
      %72 = vsyncadd [#allocation9], 0
      %s73 = sshll.u32 %s4, 4
      %s74 = int_to_ptr.hbm [resolvable:$true] %s73
      %s75 = sshll.u32 [#allocation10], 4
      %s76 = int_to_ptr.vmem [resolvable:$true] %s75
      %81 = dma.hbm_to_vmem [thread:$0]  %s74, 256, %s76, [#allocation9], 64, 64, 4
    $region21: #{tpu_custom_call.1} parent=1 // pred_fallthru
      _
    // Predicated region
    $region22: #{tpu_custom_call.1} parent=1 // pred_check
      _
    $region23: #{tpu_custom_call.1} parent=1 // pred_check_branch
      %83 = sbr.rel (0) target = $region25
    $region24: #{tpu_custom_call.1} parent=1 // pred_region
      %85 = vsyncadd [#allocation12], 0
      %s86 = sshll.u32 %s5, 4
      %s87 = int_to_ptr.hbm [resolvable:$true] %s86
      %s88 = sshll.u32 [#allocation11], 4
      %s89 = int_to_ptr.vmem [resolvable:$true] %s88
      %94 = dma.hbm_to_vmem [thread:$0]  %s87, 256, %s89, [#allocation12], 64, 64, 4
    $region25: #{tpu_custom_call.1} parent=1 // pred_fallthru
      _
    // Predicated region
    $region26: #{tpu_custom_call.1} parent=1 // pred_check
      _
    $region27: #{tpu_custom_call.1} parent=1 // pred_check_branch
      %96 = sbr.rel (0) target = $region29
    $region28: #{tpu_custom_call.1} parent=1 // pred_region
      %98 = vsyncadd [#allocation12], 0
      %s99 = sshll.u32 %s6, 4
      %s100 = int_to_ptr.hbm [resolvable:$true] %s99
      %s101 = sshll.u32 [#allocation13], 4
      %s102 = int_to_ptr.vmem [resolvable:$true] %s101
      %107 = dma.hbm_to_vmem [thread:$0]  %s100, 256, %s102, [#allocation12], 64, 64, 4
    $region29: #{tpu_custom_call.1} parent=1 // pred_fallthru
      _
    // Predicated region
    $region30: #{tpu_custom_call.1} parent=1 // pred_check
      _
    $region31: #{tpu_custom_call.1} parent=1 // pred_check_branch
      %109 = sbr.rel (0) target = $region33
    $region32: #{tpu_custom_call.1} parent=1 // pred_region
      %111 = dma.done [#allocation3], 256
    $region33: #{tpu_custom_call.1} parent=1 // pred_fallthru
      _
    // Predicated region
    $region34: #{tpu_custom_call.1} parent=1 // pred_check
      _
    $region35: #{tpu_custom_call.1} parent=1 // pred_check_branch
      %113 = sbr.rel (0) target = $region37
    $region36: #{tpu_custom_call.1} parent=1 // pred_region
      %115 = dma.done [#allocation6], 256
    $region37: #{tpu_custom_call.1} parent=1 // pred_fallthru
      _
    // Predicated region
    $region38: #{tpu_custom_call.1} parent=1 // pred_check
      _
    $region39: #{tpu_custom_call.1} parent=1 // pred_check_branch
      %117 = sbr.rel (0) target = $region41
    $region40: #{tpu_custom_call.1} parent=1 // pred_region
      %119 = dma.done [#allocation6], 256
    $region41: #{tpu_custom_call.1} parent=1 // pred_fallthru
      _
    // Predicated region
    $region42: #{tpu_custom_call.1} parent=1 // pred_check
      _
    $region43: #{tpu_custom_call.1} parent=1 // pred_check_branch
      %121 = sbr.rel (0) target = $region45
    $region44: #{tpu_custom_call.1} parent=1 // pred_region
      %123 = dma.done [#allocation9], 256
    $region45: #{tpu_custom_call.1} parent=1 // pred_fallthru
      _
    // Predicated region
    $region46: #{tpu_custom_call.1} parent=1 // pred_check
      _
    $region47: #{tpu_custom_call.1} parent=1 // pred_check_branch
      %125 = sbr.rel (0) target = $region49
    $region48: #{tpu_custom_call.1} parent=1 // pred_region
      %127 = dma.done [#allocation9], 256
    $region49: #{tpu_custom_call.1} parent=1 // pred_fallthru
      _
    // Predicated region
    $region50: #{tpu_custom_call.1} parent=1 // pred_check
      _
    $region51: #{tpu_custom_call.1} parent=1 // pred_check_branch
      %129 = sbr.rel (0) target = $region53
    $region52: #{tpu_custom_call.1} parent=1 // pred_region
      %131 = dma.done [#allocation12], 256
    $region53: #{tpu_custom_call.1} parent=1 // pred_fallthru
      _
    // Predicated region
    $region54: #{tpu_custom_call.1} parent=1 // pred_check
      _
    $region55: #{tpu_custom_call.1} parent=1 // pred_check_branch
      %133 = sbr.rel (0) target = $region57
    $region56: #{tpu_custom_call.1} parent=1 // pred_region
      %135 = dma.done [#allocation12], 256
    $region57: #{tpu_custom_call.1} parent=1 // pred_fallthru
      _
    %v137 = vld [vmem:[#allocation2] sm:$0xff]
    %v138 = vld [vmem:[#allocation2 + $0x8] sm:$0xff]
    %v139 = vpack.c.bf16 %v138, %v137
    %v140 = vld [vmem:[#allocation5] sm:$0xff]
    %v141 = vld [vmem:[#allocation5 + $0x8] sm:$0xff]
    %v142 = vpack.c.bf16 %v141, %v140
    %v143 = vld [vmem:[#allocation7] sm:$0xff]
    %v144 = vld [vmem:[#allocation7 + $0x8] sm:$0xff]
    %v145 = vpack.c.bf16 %v144, %v143
    %v146 = vld [vmem:[#allocation8] sm:$0xf]
    %v147 = vld [vmem:[#allocation8 + $0x4] sm:$0xf]
    %v148 = vld [vmem:[#allocation8 + $0x8] sm:$0xf]
    %v149 = vld [vmem:[#allocation8 + $0xc] sm:$0xf]
    %v154 = vunpack.c.l.b16 %v146
    %v155 = vunpack.c.l.b16 %v147
    %v156 = vunpack.c.l.b16 %v148
    %v157 = vunpack.c.l.b16 %v149
    %v158 = vpack.c.b16 %v155, %v154
    %v159 = vpack.c.b16 %v157, %v156
    %vm162 = vcmask 261120
    %v164 = vsel %vm162, %v139, 0
    %166 = vmatpush.bf16.msra.mxu0 0
    %167 = vmatpush.bf16.msra.mxu0 0
    %168 = vmatpush.bf16.msra.mxu0 0
    %169 = vmatpush.bf16.msra.mxu0 0
    %170 = vmatpush.bf16.msra.mxu0 0
    %171 = vmatpush.bf16.msra.mxu0 0
    %172 = vmatpush.bf16.msra.mxu0 %v159
    %173 = vmatpush.bf16.msra.mxu0 %v158
    %174 = vmatmul.bf16.gmra.mxu0 %v164
    %v175 = vpop.f32.mrf.mxu0
    %v176 = vadd.f32 0.0, %v175
    %v177 = vpop.f32.mrf.mxu0
    %v178 = vadd.f32 0.0, %v177
    %179 = vdwg.mxu0
    %v180 = vpack.c.bf16 %v176, %v176
    %v181 = vpack.c.bf16 %v178, %v178
    %v182 = vld [vmem:[#allocation10] sm:$0xf]
    %v183 = vld [vmem:[#allocation10 + $0x4] sm:$0xf]
    %v184 = vld [vmem:[#allocation10 + $0x8] sm:$0xf]
    %v185 = vld [vmem:[#allocation10 + $0xc] sm:$0xf]
    %v190 = vunpack.c.l.b16 %v182
    %v191 = vunpack.c.l.b16 %v183
    %v192 = vunpack.c.l.b16 %v184
    %v193 = vunpack.c.l.b16 %v185
    %v194 = vpack.c.b16 %v191, %v190
    %v195 = vpack.c.b16 %v193, %v192
    %v199 = vsel %vm162, %v142, 0
    %201 = vmatpush.bf16.msra.mxu0 0
    %202 = vmatpush.bf16.msra.mxu0 0
    %203 = vmatpush.bf16.msra.mxu0 0
    %204 = vmatpush.bf16.msra.mxu0 0
    %205 = vmatpush.bf16.msra.mxu0 0
    %206 = vmatpush.bf16.msra.mxu0 0
    %207 = vmatpush.bf16.msra.mxu0 %v195
    %208 = vmatpush.bf16.msra.mxu0 %v194
    %209 = vmatmul.bf16.gmra.mxu0 %v199
    %v210 = vpop.f32.mrf.mxu0
    %v211 = vadd.f32 0.0, %v210
    %v212 = vpop.f32.mrf.mxu0
    %v213 = vadd.f32 0.0, %v212
    %214 = vdwg.mxu0
    %v215 = vpack.c.bf16 %v211, %v211
    %v216 = vpack.c.bf16 %v213, %v213
    %v217 = vld [vmem:[#allocation11] sm:$0xf]
    %v218 = vld [vmem:[#allocation11 + $0x4] sm:$0xf]
    %v219 = vld [vmem:[#allocation11 + $0x8] sm:$0xf]
    %v220 = vld [vmem:[#allocation11 + $0xc] sm:$0xf]
    %v225 = vunpack.c.l.b16 %v217
    %v226 = vunpack.c.l.b16 %v218
    %v227 = vunpack.c.l.b16 %v219
    %v228 = vunpack.c.l.b16 %v220
    %v229 = vpack.c.b16 %v226, %v225
    %v230 = vpack.c.b16 %v228, %v227
    %v234 = vsel %vm162, %v145, 0
    %236 = vmatpush.bf16.msra.mxu0 0
    %237 = vmatpush.bf16.msra.mxu0 0
    %238 = vmatpush.bf16.msra.mxu0 0
    %239 = vmatpush.bf16.msra.mxu0 0
    %240 = vmatpush.bf16.msra.mxu0 0
    %241 = vmatpush.bf16.msra.mxu0 0
    %242 = vmatpush.bf16.msra.mxu0 %v230
    %243 = vmatpush.bf16.msra.mxu0 %v229
    %244 = vmatmul.bf16.gmra.mxu0 %v234
    %v245 = vpop.f32.mrf.mxu0
    %v246 = vadd.f32 0.0, %v245
    %v247 = vpop.f32.mrf.mxu0
    %v248 = vadd.f32 0.0, %v247
    %249 = vdwg.mxu0
    %v250 = vpack.c.bf16 %v246, %v246
    %v251 = vpack.c.bf16 %v248, %v248
    %vm252 = vcmask 130048
    %v254 = vsel %vm252, %v180, 0
    %v257 = vsel %vm252, %v215, 0
    %259 = vmatpush.bf16.xpose.msra.mxu0 0
    %260 = vmatpush.bf16.xpose.msra.mxu0 0
    %261 = vmatpush.bf16.xpose.msra.mxu0 0
    %262 = vmatpush.bf16.xpose.msra.mxu0 0
    %263 = vmatpush.bf16.xpose.msra.mxu0 0
    %264 = vmatpush.bf16.xpose.msra.mxu0 0
    %265 = vmatpush.bf16.xpose.msra.mxu0 0
    %266 = vmatpush.bf16.xpose.msra.mxu0 %v257
    %267 = vmatmul.bf16.gmra.mxu0 %v254
    %v268 = vpop.f32.mrf.mxu0
    %v269 = vadd.f32 0.0, %v268
    %v270 = vpop.f32.mrf.mxu0
    %271 = vdwg.mxu0
    %v273 = vsel %vm252, %v181, 0
    %v276 = vsel %vm252, %v216, 0
    %278 = vmatpush.bf16.xpose.msra.mxu0 0
    %279 = vmatpush.bf16.xpose.msra.mxu0 0
    %280 = vmatpush.bf16.xpose.msra.mxu0 0
    %281 = vmatpush.bf16.xpose.msra.mxu0 0
    %282 = vmatpush.bf16.xpose.msra.mxu0 0
    %283 = vmatpush.bf16.xpose.msra.mxu0 0
    %284 = vmatpush.bf16.xpose.msra.mxu0 0
    %285 = vmatpush.bf16.xpose.msra.mxu0 %v276
    %286 = vmatmul.bf16.gmra.mxu0 %v273
    %v287 = vpop.f32.mrf.mxu0
    %v288 = vadd.f32 0.0, %v287
    %v289 = vpop.f32.mrf.mxu0
    %290 = vdwg.mxu0
    %vm291 = vcmask 64512
    %v292 = vsel %vm291, %v269, -inf
    %293 = vmax.xlane.f32.xlu0 %v292
    %v294 = vpop.xlane.xlu0 %293
    %v295 = vsel %vm291, %v288, -inf
    %296 = vmax.xlane.f32.xlu0 %v295
    %v297 = vpop.xlane.xlu0 %296
    %v298 = vsub.f32 %v269, %v294
    %v299 = vsub.f32 %v288, %v297
    %v300 = vmul.f32 %v298, 1.442695
    %v301 = vpow.pop %v300
    %v302 = vmul.f32 %v299, 1.442695
    %v303 = vpow.pop %v302
    %v304 = vsel %vm291, %v301, 0.0
    %305 = vadd.xlane.f32.xlu0 %v304
    %v306 = vpop.xlane.xlu0 %305
    %v307 = vsel %vm291, %v303, 0.0
    %308 = vadd.xlane.f32.xlu0 %v307
    %v309 = vpop.xlane.xlu0 %308
    %v310 = vrcp.pop %v306
    %v311 = vrcp.pop %v309
    %v312 = vmul.f32 %v301, %v310
    %v313 = vmul.f32 %v303, %v311
    %v314 = vpack.c.bf16 %v312, %v312
    %v315 = vpack.c.bf16 %v313, %v313
    %v317 = vsel %vm291, %v314, 0
    %vm319 = vcmask 1043456
    %v321 = vsel %vm319, %v250, 0
    %323 = vmatpush.bf16.msra.mxu0 0
    %324 = vmatpush.bf16.msra.mxu0 0
    %325 = vmatpush.bf16.msra.mxu0 0
    %326 = vmatpush.bf16.msra.mxu0 0
    %327 = vmatpush.bf16.msra.mxu0 0
    %328 = vmatpush.bf16.msra.mxu0 0
    %329 = vmatpush.bf16.msra.mxu0 0
    %330 = vmatpush.bf16.msra.mxu0 %v321
    %331 = vmatmul.bf16.gmra.mxu0 %v317
    %v332 = vpop.f32.mrf.mxu0
    %v333 = vadd.f32 0.0, %v332
    %v334 = vpop.f32.mrf.mxu0
    %335 = vdwg.mxu0
    %v337 = vsel %vm291, %v315, 0
    %v340 = vsel %vm319, %v251, 0
    %342 = vmatpush.bf16.msra.mxu0 0
    %343 = vmatpush.bf16.msra.mxu0 0
    %344 = vmatpush.bf16.msra.mxu0 0
    %345 = vmatpush.bf16.msra.mxu0 0
    %346 = vmatpush.bf16.msra.mxu0 0
    %347 = vmatpush.bf16.msra.mxu0 0
    %348 = vmatpush.bf16.msra.mxu0 0
    %349 = vmatpush.bf16.msra.mxu0 %v340
    %350 = vmatmul.bf16.gmra.mxu0 %v337
    %v351 = vpop.f32.mrf.mxu0
    %v352 = vadd.f32 0.0, %v351
    %v353 = vpop.f32.mrf.mxu0
    %354 = vdwg.mxu0
    %v355 = vpack.c.bf16 %v333, %v333
    %v356 = vpack.c.bf16 %v352, %v352
    %v358 = vunpack.c.l.b16 %v180
    %v359 = vpack.c.b16 %v358, %v358
    %360 = vrot.lane.b32.xlu0 %v359, 112
    %v361 = vpop.permute.xlu0 %360
    %v363 = vunpack.c.l.b16 %v215
    %v364 = vpack.c.b16 %v363, %v363
    %365 = vrot.lane.b32.xlu0 %v364, 112
    %v366 = vpop.permute.xlu0 %365
    %v368 = vsel %vm252, %v361, 0
    %v371 = vsel %vm252, %v366, 0
    %373 = vmatpush.bf16.xpose.msra.mxu0 0
    %374 = vmatpush.bf16.xpose.msra.mxu0 0
    %375 = vmatpush.bf16.xpose.msra.mxu0 0
    %376 = vmatpush.bf16.xpose.msra.mxu0 0
    %377 = vmatpush.bf16.xpose.msra.mxu0 0
    %378 = vmatpush.bf16.xpose.msra.mxu0 0
    %379 = vmatpush.bf16.xpose.msra.mxu0 0
    %380 = vmatpush.bf16.xpose.msra.mxu0 %v371
    %381 = vmatmul.bf16.gmra.mxu0 %v368
    %v382 = vpop.f32.mrf.mxu0
    %v383 = vadd.f32 0.0, %v382
    %v384 = vpop.f32.mrf.mxu0
    %385 = vdwg.mxu0
    %v387 = vunpack.c.l.b16 %v181
    %v388 = vpack.c.b16 %v387, %v387
    %389 = vrot.lane.b32.xlu0 %v388, 112
    %v390 = vpop.permute.xlu0 %389
    %v392 = vunpack.c.l.b16 %v216
    %v393 = vpack.c.b16 %v392, %v392
    %394 = vrot.lane.b32.xlu0 %v393, 112
    %v395 = vpop.permute.xlu0 %394
    %v397 = vsel %vm252, %v390, 0
    %v400 = vsel %vm252, %v395, 0
    %402 = vmatpush.bf16.xpose.msra.mxu0 0
    %403 = vmatpush.bf16.xpose.msra.mxu0 0
    %404 = vmatpush.bf16.xpose.msra.mxu0 0
    %405 = vmatpush.bf16.xpose.msra.mxu0 0
    %406 = vmatpush.bf16.xpose.msra.mxu0 0
    %407 = vmatpush.bf16.xpose.msra.mxu0 0
    %408 = vmatpush.bf16.xpose.msra.mxu0 0
    %409 = vmatpush.bf16.xpose.msra.mxu0 %v400
    %410 = vmatmul.bf16.gmra.mxu0 %v397
    %v411 = vpop.f32.mrf.mxu0
    %v412 = vadd.f32 0.0, %v411
    %v413 = vpop.f32.mrf.mxu0
    %414 = vdwg.mxu0
    %v415 = vsel %vm291, %v383, -inf
    %416 = vmax.xlane.f32.xlu0 %v415
    %v417 = vpop.xlane.xlu0 %416
    %v418 = vsel %vm291, %v412, -inf
    %419 = vmax.xlane.f32.xlu0 %v418
    %v420 = vpop.xlane.xlu0 %419
    %v421 = vsub.f32 %v383, %v417
    %v422 = vsub.f32 %v412, %v420
    %v423 = vmul.f32 %v421, 1.442695
    %v424 = vpow.pop %v423
    %v425 = vmul.f32 %v422, 1.442695
    %v426 = vpow.pop %v425
    %v427 = vsel %vm291, %v424, 0.0
    %428 = vadd.xlane.f32.xlu0 %v427
    %v429 = vpop.xlane.xlu0 %428
    %v430 = vsel %vm291, %v426, 0.0
    %431 = vadd.xlane.f32.xlu0 %v430
    %v432 = vpop.xlane.xlu0 %431
    %v433 = vrcp.pop %v429
    %v434 = vrcp.pop %v432
    %v435 = vmul.f32 %v424, %v433
    %v436 = vmul.f32 %v426, %v434
    %v437 = vpack.c.bf16 %v435, %v435
    %v438 = vpack.c.bf16 %v436, %v436
    %v440 = vunpack.c.l.b16 %v250
    %v441 = vpack.c.b16 %v440, %v440
    %442 = vrot.lane.b32.xlu0 %v441, 112
    %v443 = vpop.permute.xlu0 %442
    %v445 = vsel %vm291, %v437, 0
    %v448 = vsel %vm319, %v443, 0
    %450 = vmatpush.bf16.msra.mxu0 0
    %451 = vmatpush.bf16.msra.mxu0 0
    %452 = vmatpush.bf16.msra.mxu0 0
    %453 = vmatpush.bf16.msra.mxu0 0
    %454 = vmatpush.bf16.msra.mxu0 0
    %455 = vmatpush.bf16.msra.mxu0 0
    %456 = vmatpush.bf16.msra.mxu0 0
    %457 = vmatpush.bf16.msra.mxu0 %v448
    %458 = vmatmul.bf16.gmra.mxu0 %v445
    %v459 = vpop.f32.mrf.mxu0
    %v460 = vadd.f32 0.0, %v459
    %v461 = vpop.f32.mrf.mxu0
    %462 = vdwg.mxu0
    %v464 = vunpack.c.l.b16 %v251
    %v465 = vpack.c.b16 %v464, %v464
    %466 = vrot.lane.b32.xlu0 %v465, 112
    %v467 = vpop.permute.xlu0 %466
    %v469 = vsel %vm291, %v438, 0
    %v472 = vsel %vm319, %v467, 0
    %474 = vmatpush.bf16.msra.mxu0 0
    %475 = vmatpush.bf16.msra.mxu0 0
    %476 = vmatpush.bf16.msra.mxu0 0
    %477 = vmatpush.bf16.msra.mxu0 0
    %478 = vmatpush.bf16.msra.mxu0 0
    %479 = vmatpush.bf16.msra.mxu0 0
    %480 = vmatpush.bf16.msra.mxu0 0
    %481 = vmatpush.bf16.msra.mxu0 %v472
    %482 = vmatmul.bf16.gmra.mxu0 %v469
    %v483 = vpop.f32.mrf.mxu0
    %v484 = vadd.f32 0.0, %v483
    %v485 = vpop.f32.mrf.mxu0
    %486 = vdwg.mxu0
    %v487 = vpack.c.bf16 %v460, %v460
    %v488 = vpack.c.bf16 %v484, %v484
    %v491 = vunpack.c.l.b16 %v487
    %v492 = vunpack.c.l.b16 %v488
    %v493 = vpack.c.b16 %v491, %v491
    %v494 = vpack.c.b16 %v492, %v492
    %495 = vrot.lane.b32.xlu0 %v493, 16
    %v496 = vpop.permute.xlu0 %495
    %497 = vrot.lane.b32.xlu0 %v494, 16
    %v498 = vpop.permute.xlu0 %497
    %v501 = vsel %vm252, %v355, %v496
    %v504 = vsel %vm252, %v356, %v498
    %v505 = vld [vmem:[#allocation13] sm:$0xf]
    %v506 = vld [vmem:[#allocation13 + $0x4] sm:$0xf]
    %v507 = vld [vmem:[#allocation13 + $0x8] sm:$0xf]
    %v508 = vld [vmem:[#allocation13 + $0xc] sm:$0xf]
    %v511 = vunpack.c.l.b16 %v501
    %v512 = vunpack.c.l.b16 %v504
    %v513 = vpack.c.b16 %v512, %v511
    %v518 = vunpack.c.l.b16 %v505
    %v519 = vunpack.c.l.b16 %v506
    %v520 = vunpack.c.l.b16 %v507
    %v521 = vunpack.c.l.b16 %v508
    %v522 = vpack.c.b16 %v519, %v518
    %v523 = vpack.c.b16 %v521, %v520
    %v527 = vsel %vm162, %v513, 0
    %529 = vmatpush.bf16.msra.mxu0 0
    %530 = vmatpush.bf16.msra.mxu0 0
    %531 = vmatpush.bf16.msra.mxu0 0
    %532 = vmatpush.bf16.msra.mxu0 0
    %533 = vmatpush.bf16.msra.mxu0 0
    %534 = vmatpush.bf16.msra.mxu0 0
    %535 = vmatpush.bf16.msra.mxu0 %v523
    %536 = vmatpush.bf16.msra.mxu0 %v522
    %537 = vmatmul.bf16.gmra.mxu0 %v527
    %v538 = vpop.f32.mrf.mxu0
    %v539 = vadd.f32 0.0, %v538
    %v540 = vpop.f32.mrf.mxu0
    %v541 = vadd.f32 0.0, %v540
    %542 = vdwg.mxu0
    %v543 = vadd.f32 %v539, %v137
    %v544 = vadd.f32 %v541, %v138
    %545 = vst.msk [vmem:[#allocation14] sm:$0xff] %vm162, %v543
    %546 = vst.msk [vmem:[#allocation14 + $0x8] sm:$0xff] %vm162, %v544
    // Predicated region
    $region58: #{tpu_custom_call.1} parent=1 // pred_check
      _
    $region59: #{tpu_custom_call.1} parent=1 // pred_check_branch
      %548 = sbr.rel (0) target = $region61
    $region60: #{tpu_custom_call.1} parent=1 // pred_region
      %550 = vsyncadd [#allocation4], 0
      %s551 = sshll.u32 [#allocation14], 4
      %s552 = int_to_ptr.vmem [resolvable:$true] %s551
      %s553 = sshll.u32 %s7, 4
      %s554 = int_to_ptr.hbm [resolvable:$true] %s553
      %559 = dma.vmem_to_hbm [thread:$0]  %s552, 256, %s554, [#allocation4], 128, 128, 8
    $region61: #{tpu_custom_call.1} parent=1 // pred_fallthru
      _
    // Predicated region
    $region62: #{tpu_custom_call.1} parent=1 // pred_check
      _
    $region63: #{tpu_custom_call.1} parent=1 // pred_check_branch
      %561 = sbr.rel (0) target = $region65
    $region64: #{tpu_custom_call.1} parent=1 // pred_region
      %563 = dma.done [#allocation4], 256
    $region65: #{tpu_custom_call.1} parent=1 // pred_fallthru
      _
    %564 = vsyncpa [#allocation3], 1
    %565 = vsyncpa [#allocation6], 1
    %566 = vsyncpa [#allocation9], 1
    %567 = vsyncpa [#allocation12], 1
    %568 = vsyncpa [#allocation4], 1

</llo_original>
